<compile_context>
chip_gen: v5e
topology: v5e:2x2
jax: 0.10.0
libtpu: 0.0.40
codegen_flags: <defaults>
</compile_context>

<pallas_src>
import functools

import jax
import jax.numpy as jnp
from jax import lax
from jax.experimental import pallas as pl
from jax.experimental.pallas import tpu as pltpu


def _rn_kernel(bf_ref, bft_ref, bc_ref, bct_ref, q_ref,
               w_oi_ref, w_oj_ref, w_q_ref, w_bij_ref, w_bji_ref, w_pair_ref, b1_ref,
               w2s_ref, b2s_ref, w2c_ref, b2c_ref, w3c_ref, b3c_ref,
               scores_ref, logits_ref,
               rowi_sc, rowj_sc, score_sc, dot_sc, iou_sc, oij_sc, oji_sc,
               *, N, D, C, Q, H, NCLS, TI):
    f32 = jnp.float32
    bf16 = jnp.bfloat16
    t = pl.program_id(1)
    i0 = pl.multiple_of(t * TI, TI)

    # ---------- once per batch element: cached row-factorised layer-1 terms ----------
    @pl.when(t == 0)
    def _():
        bf = bf_ref[0]                                   # (N, D)  bf16
        bc = bc_ref[0]                                   # (N, C)  f32
        q = q_ref[0]                                     # (1, Q)  f32
        qb = jnp.dot(q, w_q_ref[...], preferred_element_type=f32) + b1_ref[...]     # (1, 2H)
        # row_i carries the o_i and b_ij blocks plus the (per-pair-constant) q-term + bias.
        rowi_sc[...] = (jnp.dot(bf, w_oi_ref[...], preferred_element_type=f32)
                        + jnp.dot(bc, w_bij_ref[...], preferred_element_type=f32)
                        + qb)                                                        # (N, 2H)
        rowj_sc[...] = (jnp.dot(bf, w_oj_ref[...], preferred_element_type=f32)
                        + jnp.dot(bc, w_bji_ref[...], preferred_element_type=f32))   # (N, 2H)

    # ---------- pairwise scalar features for this tile of i-rows (lane-dense (TI, N)) ----------
    bf_i = bf_ref[0, pl.ds(i0, TI), :]                   # (TI, D) bf16
    dot_t = jnp.dot(bf_i, bft_ref[0], preferred_element_type=f32)       # (TI, N) on the MXU

    bc_i = bc_ref[0, pl.ds(i0, TI), :]                   # (TI, C) f32
    bc_j = bct_ref[0]                                    # (C, N)  f32
    x1i, y1i, x2i, y2i = bc_i[:, 0:1], bc_i[:, 1:2], bc_i[:, 2:3], bc_i[:, 3:4]   # (TI, 1)
    x1j, y1j, x2j, y2j = bc_j[0:1, :], bc_j[1:2, :], bc_j[2:3, :], bc_j[3:4, :]   # (1, N)
    area_i = (x2i - x1i) * (y2i - y1i)                   # (TI, 1)
    area_j = (x2j - x1j) * (y2j - y1j)                   # (1, N)
    lr = jnp.maximum(jnp.minimum(x2i, x2j) - jnp.maximum(x1i, x1j), 0.0)
    ud = jnp.maximum(jnp.minimum(y2i, y2j) - jnp.maximum(y1i, y1j), 0.0)
    ov = lr * ud                                         # (TI, N)
    eps = 1e-6
    iou_t = ov * pl.reciprocal(area_i + eps + area_j - ov, approx=True)
    oij_t = ov * pl.reciprocal(area_i + eps, approx=True)
    oji_t = ov * pl.reciprocal(area_j + eps, approx=True)

    # Cache the pair scalars so the cls head can gather the selected pairs on the last tile.
    dot_sc[pl.ds(i0, TI), :] = dot_t
    iou_sc[pl.ds(i0, TI), :] = iou_t
    oij_sc[pl.ds(i0, TI), :] = oij_t
    oji_sc[pl.ds(i0, TI), :] = oji_t

    # ---------- score head over this (TI, N) block of pairs ----------
    pair = jnp.stack([dot_t, iou_t, oij_t, oji_t], axis=-1)              # (TI, N, 4)
    pair_h = jnp.dot(pair.reshape(TI * N, 4), w_pair_ref[...][:, :H],
                     preferred_element_type=f32).reshape(TI, N, H)        # MXU, K=4
    row_i_s = rowi_sc[pl.ds(i0, TI), :][:, :H]                            # (TI, H) (q + b1 folded in)
    row_j_s = rowj_sc[...][:, :H]                                         # (N, H)
    h_s = jnp.maximum(row_i_s[:, None, :] + row_j_s[None, :, :] + pair_h, 0.0)   # (TI, N, H)
    # Linear(H,1): tile-local VPU multiply + lane reduce over H; output is lane-dense (TI, N).
    score_sc[pl.ds(i0, TI), :] = (jnp.sum(h_s * w2s_ref[...][None], axis=-1)
                                  + b2s_ref[...])                         # (TI, N)

    # ---------- last tile: argmax over partners, cls head on the N selected pairs only ----------
    @pl.when(t == pl.num_programs(1) - 1)
    def _():
        score = score_sc[...]                                             # (N, N)
        smax = jnp.max(score, axis=1, keepdims=True)                      # (N, 1)
        col = lax.broadcasted_iota(jnp.int32, (N, N), 1)
        # first maximal index, like torch.max
        idx = jnp.min(jnp.where(score == smax, col, N), axis=1, keepdims=True)
        onehot = (col == idx).astype(f32)                                 # (N, N)

        scores_ref[0] = smax                                              # score at argmax == row max

        row_i_c = rowi_sc[...][:, H:]                                     # (N, H) (q + b1c folded in)
        row_j_c = jnp.dot(onehot, rowj_sc[...][:, H:],
                          preferred_element_type=f32)                     # gather row_j[j*]  (N, H)
        d_sel = jnp.sum(onehot * dot_sc[...], axis=1, keepdims=True)      # (N, 1)
        i_sel = jnp.sum(onehot * iou_sc[...], axis=1, keepdims=True)
        a_sel = jnp.sum(onehot * oij_sc[...], axis=1, keepdims=True)
        b_sel = jnp.sum(onehot * oji_sc[...], axis=1, keepdims=True)
        pf = jnp.concatenate([d_sel, i_sel, a_sel, b_sel], axis=-1)       # (N, 4)
        pair_c = jnp.dot(pf, w_pair_ref[...][:, H:], preferred_element_type=f32)  # (N, H)

        h1 = jnp.maximum(row_i_c + row_j_c + pair_c, 0.0)                 # (N, H)
        h2 = jnp.maximum(jnp.dot(h1.astype(bf16), w2c_ref[...],
                                 preferred_element_type=f32) + b2c_ref[...], 0.0)  # (N, H)
        logits_ref[0] = (jnp.dot(h2.astype(bf16), w3c_ref[...],
                                 preferred_element_type=f32) + b3c_ref[...])        # (N, NCLS)


def rn_forward(box_feats, box_coords, q_rnn, params, *, H, NCLS, TI=8):
    B, N, D = box_feats.shape
    C = box_coords.shape[2]
    Q = q_rnn.shape[1]
    assert TI % 8 == 0 and N % TI == 0, "i-tile must be a multiple of 8 and divide N"
    T = N // TI
    f32, bf16 = jnp.float32, jnp.bfloat16
    fo = 2 * D + Q

    # ---- host-side weight plumbing: split W1 by input block, fuse score|cls along H ----
    def split_w1(w1):
        return (w1[0:D], w1[D:2 * D], w1[2 * D:fo],
                w1[fo + 1:fo + 1 + C], w1[fo + 1 + C:fo + 1 + 2 * C],
                jnp.concatenate([w1[fo:fo + 1],                       # dot
                                 w1[fo + 1 + 2 * C:fo + 2 + 2 * C],   # iou
                                 w1[fo + 2 + 2 * C:fo + 3 + 2 * C],   # o_ij
                                 w1[fo + 3 + 2 * C:fo + 4 + 2 * C]],  # o_ji
                                axis=0))

    s_oi, s_oj, s_q, s_bij, s_bji, s_pair = split_w1(params["w1s"])
    c_oi, c_oj, c_q, c_bij, c_bji, c_pair = split_w1(params["w1c"])
    w_oi = jnp.concatenate([s_oi, c_oi], axis=1).astype(bf16)      # (D, 2H)
    w_oj = jnp.concatenate([s_oj, c_oj], axis=1).astype(bf16)      # (D, 2H)
    w_q = jnp.concatenate([s_q, c_q], axis=1)                      # (Q, 2H)
    w_bij = jnp.concatenate([s_bij, c_bij], axis=1)                # (C, 2H)
    w_bji = jnp.concatenate([s_bji, c_bji], axis=1)                # (C, 2H)
    w_pair = jnp.concatenate([s_pair, c_pair], axis=1)             # (4, 2H)
    b1 = jnp.concatenate([params["b1s"], params["b1c"]], axis=1)   # (1, 2H)

    bf_b = box_feats.astype(bf16)
    bf_t = jnp.transpose(bf_b, (0, 2, 1))                          # (B, D, N) for dot = bf @ bf^T
    bc = box_coords.astype(f32)
    bc_t = jnp.transpose(bc, (0, 2, 1))                            # (B, C, N) lane-dense j-coords
    q3 = q_rnn.reshape(B, 1, Q).astype(f32)

    w2s, b2s = params["w2s"].astype(f32), params["b2s"]
    w2c, b2c = params["w2c"].astype(bf16), params["b2c"]
    w3c, b3c = params["w3c"].astype(bf16), params["b3c"]

    kern = functools.partial(_rn_kernel, N=N, D=D, C=C, Q=Q, H=H, NCLS=NCLS, TI=TI)

    def batch_spec(shape):
        return pl.BlockSpec(shape, lambda b, t: (b, 0, 0))

    def const_spec(shape):
        return pl.BlockSpec(shape, lambda b, t: (0,) * len(shape))

    in_specs = [
        batch_spec((1, N, D)), batch_spec((1, D, N)),
        batch_spec((1, N, C)), batch_spec((1, C, N)),
        batch_spec((1, 1, Q)),
        const_spec((D, 2 * H)), const_spec((D, 2 * H)), const_spec((Q, 2 * H)),
        const_spec((C, 2 * H)), const_spec((C, 2 * H)), const_spec((4, 2 * H)),
        const_spec((1, 2 * H)),
        const_spec((1, H)), const_spec((1, 1)),
        const_spec((H, H)), const_spec((1, H)),
        const_spec((H, NCLS)), const_spec((1, NCLS)),
    ]
    out_specs = [
        pl.BlockSpec((1, N, 1), lambda b, t: (b, 0, 0)),
        pl.BlockSpec((1, N, NCLS), lambda b, t: (b, 0, 0)),
    ]
    out_shape = [
        jax.ShapeDtypeStruct((B, N, 1), f32),
        jax.ShapeDtypeStruct((B, N, NCLS), f32),
    ]
    scratch_shapes = [
        pltpu.VMEM((N, 2 * H), f32),   # row_i terms (score | cls), q + bias folded in
        pltpu.VMEM((N, 2 * H), f32),   # row_j terms (score | cls)
        pltpu.VMEM((N, N), f32),       # score matrix (accumulated over i-tiles)
        pltpu.VMEM((N, N), f32),       # dot
        pltpu.VMEM((N, N), f32),       # iou
        pltpu.VMEM((N, N), f32),       # o_ij
        pltpu.VMEM((N, N), f32),       # o_ji
    ]
    return pl.pallas_call(
        kern,
        out_shape=out_shape,
        grid_spec=pltpu.PrefetchScalarGridSpec(
            num_scalar_prefetch=0, grid=(B, T),
            in_specs=in_specs, out_specs=out_specs,
            scratch_shapes=scratch_shapes),
        compiler_params=pltpu.CompilerParams(
            dimension_semantics=("parallel", "arbitrary"),
            vmem_limit_bytes=64 * 1024 * 1024),
    )(bf_b, bf_t, bc, bc_t, q3,
      w_oi, w_oj, w_q, w_bij, w_bji, w_pair, b1,
      w2s, b2s, w2c, b2c, w3c, b3c)


def init_params(key, *, D, Q, C, H, NCLS, E):
    insize = 2 * D + Q + (4 + 2 * C)
    ks = jax.random.split(key, 7)
    s = 0.05
    return {
        # question-encoder stand-in (plain JAX glue)
        "wq_proj": jax.random.normal(ks[0], (E, Q), jnp.float32) * s,
        "bq_proj": jnp.zeros((Q,), jnp.float32),
        # fscore: Linear(insize,H) -> ReLU -> Linear(H,1)
        "w1s": jax.random.normal(ks[1], (insize, H), jnp.float32) * s,
        "b1s": jnp.zeros((1, H), jnp.float32),
        "w2s": jax.random.normal(ks[2], (1, H), jnp.float32) * s,   # Linear(H,1) weight (out=1,in=H)
        "b2s": jnp.zeros((1, 1), jnp.float32),
        # fcls: Linear(insize,H) -> ReLU -> Linear(H,H) -> ReLU -> Linear(H,NCLS)
        "w1c": jax.random.normal(ks[3], (insize, H), jnp.float32) * s,
        "b1c": jnp.zeros((1, H), jnp.float32),
        "w2c": jax.random.normal(ks[4], (H, H), jnp.float32) * s,
        "b2c": jnp.zeros((1, H), jnp.float32),
        "w3c": jax.random.normal(ks[5], (H, NCLS), jnp.float32) * s,
        "b3c": jnp.zeros((1, NCLS), jnp.float32),
    }


if __name__ == "__main__":
    # Small shapes standing in for the original (N=100, I_CNN=2048, Q_GRU_out=1024, LINsize=1024)
    B, N, D, C, Q, H, NCLS = 2, 16, 32, 6, 32, 128, 2
    T_tok, E = 8, 16     # question tokens / word-embedding dim (GloVe=300 in the original)
    TI = 8               # i-row tile (2 tiles -> exercises the tiled/accumulate path)

    key = jax.random.PRNGKey(0)
    k_bf, k_xy, k_wh, k_q, k_p = jax.random.split(key, 5)

    box_feats = jax.random.normal(k_bf, (B, N, D), jnp.float32)
    xy1 = jax.random.uniform(k_xy, (B, N, 2), jnp.float32, 0.0, 0.5)
    wh = jax.random.uniform(k_wh, (B, N, 2), jnp.float32, 0.1, 0.5)
    xy2 = xy1 + wh
    box_coords = jnp.concatenate([xy1, xy2, (xy1 + xy2) * 0.5], axis=-1)   # (B, N, 6)
    q_feats = jax.random.normal(k_q, (B, T_tok, E), jnp.float32)

    params = init_params(k_p, D=D, Q=Q, C=C, H=H, NCLS=NCLS, E=E)

    # TODO(synk): QuestionParser (GRU over GloVe embeddings, external dictionary/glove files)
    # is replaced by a deterministic mean-pool + linear + tanh encoder in plain JAX.
    q_rnn = jnp.tanh(jnp.mean(q_feats, axis=1) @ params["wq_proj"] + params["bq_proj"])  # (B, Q)

    scores, logits = rn_forward(box_feats, box_coords, q_rnn, params, H=H, NCLS=NCLS, TI=TI)
    jax.block_until_ready((scores, logits))
    assert scores.shape == (B, N, 1)
    assert logits.shape == (B, N, NCLS)
    print("KERNEL_OK")
</pallas_src>

<mosaic_0001>
module attributes {stable_mosaic.version = 11 : i64} {
  func.func @_rn_kernel(%arg0: i32, %arg1: i32, %arg2: memref<1x16x32xbf16, #tpu.memory_space<vmem>>, %arg3: memref<1x32x16xbf16, #tpu.memory_space<vmem>>, %arg4: memref<1x16x6xf32, #tpu.memory_space<vmem>>, %arg5: memref<1x6x16xf32, #tpu.memory_space<vmem>>, %arg6: memref<1x1x32xf32, #tpu.memory_space<vmem>>, %arg7: memref<32x256xbf16, #tpu.memory_space<vmem>>, %arg8: memref<32x256xbf16, #tpu.memory_space<vmem>>, %arg9: memref<32x256xf32, #tpu.memory_space<vmem>>, %arg10: memref<6x256xf32, #tpu.memory_space<vmem>>, %arg11: memref<6x256xf32, #tpu.memory_space<vmem>>, %arg12: memref<4x256xf32, #tpu.memory_space<vmem>>, %arg13: memref<1x256xf32, #tpu.memory_space<vmem>>, %arg14: memref<1x128xf32, #tpu.memory_space<vmem>>, %arg15: memref<1x1xf32, #tpu.memory_space<vmem>>, %arg16: memref<128x128xbf16, #tpu.memory_space<vmem>>, %arg17: memref<1x128xf32, #tpu.memory_space<vmem>>, %arg18: memref<128x2xbf16, #tpu.memory_space<vmem>>, %arg19: memref<1x2xf32, #tpu.memory_space<vmem>>, %arg20: memref<1x16x1xf32, #tpu.memory_space<vmem>>, %arg21: memref<1x16x2xf32, #tpu.memory_space<vmem>>, %arg22: memref<16x256xf32, #tpu.memory_space<vmem>>, %arg23: memref<16x256xf32, #tpu.memory_space<vmem>>, %arg24: memref<16x16xf32, #tpu.memory_space<vmem>>, %arg25: memref<16x16xf32, #tpu.memory_space<vmem>>, %arg26: memref<16x16xf32, #tpu.memory_space<vmem>>, %arg27: memref<16x16xf32, #tpu.memory_space<vmem>>, %arg28: memref<16x16xf32, #tpu.memory_space<vmem>>) attributes {dimension_semantics = [#tpu.dimension_semantics<parallel>, #tpu.dimension_semantics<arbitrary>], iteration_bounds = array<i64: 2, 2>, scalar_prefetch = 0 : i64, scratch_operands = 7 : i64, tpu.core_type = #tpu.core_type<tc>, window_params = [{transform_indices = @transform_0, window_bounds = array<i64: 1, 16, 32>}, {transform_indices = @transform_1, window_bounds = array<i64: 1, 32, 16>}, {transform_indices = @transform_2, window_bounds = array<i64: 1, 16, 6>}, {transform_indices = @transform_3, window_bounds = array<i64: 1, 6, 16>}, {transform_indices = @transform_4, window_bounds = array<i64: 1, 1, 32>}, {pipeline_mode = #tpu.pipeline_mode<synchronous>, transform_indices = @transform_5, window_bounds = array<i64: 32, 256>}, {pipeline_mode = #tpu.pipeline_mode<synchronous>, transform_indices = @transform_6, window_bounds = array<i64: 32, 256>}, {pipeline_mode = #tpu.pipeline_mode<synchronous>, transform_indices = @transform_7, window_bounds = array<i64: 32, 256>}, {pipeline_mode = #tpu.pipeline_mode<synchronous>, transform_indices = @transform_8, window_bounds = array<i64: 6, 256>}, {pipeline_mode = #tpu.pipeline_mode<synchronous>, transform_indices = @transform_9, window_bounds = array<i64: 6, 256>}, {pipeline_mode = #tpu.pipeline_mode<synchronous>, transform_indices = @transform_10, window_bounds = array<i64: 4, 256>}, {pipeline_mode = #tpu.pipeline_mode<synchronous>, transform_indices = @transform_11, window_bounds = array<i64: 1, 256>}, {pipeline_mode = #tpu.pipeline_mode<synchronous>, transform_indices = @transform_12, window_bounds = array<i64: 1, 128>}, {pipeline_mode = #tpu.pipeline_mode<synchronous>, transform_indices = @transform_13, window_bounds = array<i64: 1, 1>}, {pipeline_mode = #tpu.pipeline_mode<synchronous>, transform_indices = @transform_14, window_bounds = array<i64: 128, 128>}, {pipeline_mode = #tpu.pipeline_mode<synchronous>, transform_indices = @transform_15, window_bounds = array<i64: 1, 128>}, {pipeline_mode = #tpu.pipeline_mode<synchronous>, transform_indices = @transform_16, window_bounds = array<i64: 128, 2>}, {pipeline_mode = #tpu.pipeline_mode<synchronous>, transform_indices = @transform_17, window_bounds = array<i64: 1, 2>}, {transform_indices = @transform_18, window_bounds = array<i64: 1, 16, 1>}, {transform_indices = @transform_19, window_bounds = array<i64: 1, 16, 2>}]} {
    %c8_i32 = arith.constant 8 : i32
    %0 = arith.muli %arg1, %c8_i32 : i32
    %1 = tpu.assume_multiple %0, 8 : i32
    %c0_i32 = arith.constant 0 : i32
    %2 = arith.cmpi eq, %arg1, %c0_i32 : i32
    %3 = arith.extui %2 : i1 to i32
    %c0_i32_0 = arith.constant 0 : i32
    %4 = arith.cmpi ne, %3, %c0_i32_0 : i32
    scf.if %4 {
      %c0_33 = arith.constant 0 : index
      %c0_34 = arith.constant 0 : index
      %c0_35 = arith.constant 0 : index
      %111 = vector.load %arg2[%c0_33, %c0_34, %c0_35] : memref<1x16x32xbf16, #tpu.memory_space<vmem>>, vector<1x16x32xbf16>
      %112 = vector.shape_cast %111 : vector<1x16x32xbf16> to vector<16x32xbf16>
      %c0_36 = arith.constant 0 : index
      %c0_37 = arith.constant 0 : index
      %c0_38 = arith.constant 0 : index
      %113 = vector.load %arg4[%c0_36, %c0_37, %c0_38] : memref<1x16x6xf32, #tpu.memory_space<vmem>>, vector<1x16x6xf32>
      %114 = vector.shape_cast %113 : vector<1x16x6xf32> to vector<16x6xf32>
      %c0_39 = arith.constant 0 : index
      %c0_40 = arith.constant 0 : index
      %c0_41 = arith.constant 0 : index
      %115 = vector.load %arg6[%c0_39, %c0_40, %c0_41] : memref<1x1x32xf32, #tpu.memory_space<vmem>>, vector<1x1x32xf32>
      %116 = vector.shape_cast %115 : vector<1x1x32xf32> to vector<1x32xf32>
      %c0_42 = arith.constant 0 : index
      %c0_43 = arith.constant 0 : index
      %117 = vector.load %arg9[%c0_42, %c0_43] : memref<32x256xf32, #tpu.memory_space<vmem>>, vector<32x256xf32>
      %cst_44 = arith.constant dense<0.000000e+00> : vector<1x256xf32>
      %118 = tpu.matmul %116, %117, %cst_44 {dimension_numbers = #tpu.dot_dimension_numbers<[1], [0], [0], [1], [0, 0, 1, 1], [], []>} : vector<1x32xf32>, vector<32x256xf32>, vector<1x256xf32> -> vector<1x256xf32>
      %c0_45 = arith.constant 0 : index
      %c0_46 = arith.constant 0 : index
      %119 = vector.load %arg13[%c0_45, %c0_46] : memref<1x256xf32, #tpu.memory_space<vmem>>, vector<1x256xf32>
      %120 = arith.addf %118, %119 : vector<1x256xf32>
      %c0_47 = arith.constant 0 : index
      %c0_48 = arith.constant 0 : index
      %121 = vector.load %arg7[%c0_47, %c0_48] : memref<32x256xbf16, #tpu.memory_space<vmem>>, vector<32x256xbf16>
      %cst_49 = arith.constant dense<0.000000e+00> : vector<16x256xf32>
      %122 = tpu.matmul %112, %121, %cst_49 {dimension_numbers = #tpu.dot_dimension_numbers<[1], [0], [0], [1], [0, 0, 1, 1], [], []>} : vector<16x32xbf16>, vector<32x256xbf16>, vector<16x256xf32> -> vector<16x256xf32>
      %c0_50 = arith.constant 0 : index
      %c0_51 = arith.constant 0 : index
      %123 = vector.load %arg10[%c0_50, %c0_51] : memref<6x256xf32, #tpu.memory_space<vmem>>, vector<6x256xf32>
      %cst_52 = arith.constant dense<0.000000e+00> : vector<16x256xf32>
      %124 = tpu.matmul %114, %123, %cst_52 {dimension_numbers = #tpu.dot_dimension_numbers<[1], [0], [0], [1], [0, 0, 1, 1], [], []>} : vector<16x6xf32>, vector<6x256xf32>, vector<16x256xf32> -> vector<16x256xf32>
      %125 = arith.addf %122, %124 : vector<16x256xf32>
      %126 = vector.broadcast %120 : vector<1x256xf32> to vector<16x256xf32>
      %127 = arith.addf %125, %126 : vector<16x256xf32>
      %c0_53 = arith.constant 0 : index
      %c0_54 = arith.constant 0 : index
      %128 = vector.load %arg22[%c0_53, %c0_54] : memref<16x256xf32, #tpu.memory_space<vmem>>, vector<16x256xf32>
      tpu.vector_store %arg22[%c0_53, %c0_54], %127 {strides = array<i32>} : memref<16x256xf32, #tpu.memory_space<vmem>>, vector<16x256xf32>,
      %c0_55 = arith.constant 0 : index
      %c0_56 = arith.constant 0 : index
      %129 = vector.load %arg8[%c0_55, %c0_56] : memref<32x256xbf16, #tpu.memory_space<vmem>>, vector<32x256xbf16>
      %cst_57 = arith.constant dense<0.000000e+00> : vector<16x256xf32>
      %130 = tpu.matmul %112, %129, %cst_57 {dimension_numbers = #tpu.dot_dimension_numbers<[1], [0], [0], [1], [0, 0, 1, 1], [], []>} : vector<16x32xbf16>, vector<32x256xbf16>, vector<16x256xf32> -> vector<16x256xf32>
      %c0_58 = arith.constant 0 : index
      %c0_59 = arith.constant 0 : index
      %131 = vector.load %arg11[%c0_58, %c0_59] : memref<6x256xf32, #tpu.memory_space<vmem>>, vector<6x256xf32>
      %cst_60 = arith.constant dense<0.000000e+00> : vector<16x256xf32>
      %132 = tpu.matmul %114, %131, %cst_60 {dimension_numbers = #tpu.dot_dimension_numbers<[1], [0], [0], [1], [0, 0, 1, 1], [], []>} : vector<16x6xf32>, vector<6x256xf32>, vector<16x256xf32> -> vector<16x256xf32>
      %133 = arith.addf %130, %132 : vector<16x256xf32>
      %c0_61 = arith.constant 0 : index
      %c0_62 = arith.constant 0 : index
      %134 = vector.load %arg23[%c0_61, %c0_62] : memref<16x256xf32, #tpu.memory_space<vmem>>, vector<16x256xf32>
      tpu.vector_store %arg23[%c0_61, %c0_62], %133 {strides = array<i32>} : memref<16x256xf32, #tpu.memory_space<vmem>>, vector<16x256xf32>,
    } else {
    }
    %c0 = arith.constant 0 : index
    %5 = arith.index_cast %1 : i32 to index
    %c0_1 = arith.constant 0 : index
    %6 = vector.load %arg2[%c0, %5, %c0_1] : memref<1x16x32xbf16, #tpu.memory_space<vmem>>, vector<1x8x32xbf16>
    %7 = vector.shape_cast %6 : vector<1x8x32xbf16> to vector<8x32xbf16>
    %c0_2 = arith.constant 0 : index
    %c0_3 = arith.constant 0 : index
    %c0_4 = arith.constant 0 : index
    %8 = vector.load %arg3[%c0_2, %c0_3, %c0_4] : memref<1x32x16xbf16, #tpu.memory_space<vmem>>, vector<1x32x16xbf16>
    %9 = vector.shape_cast %8 : vector<1x32x16xbf16> to vector<32x16xbf16>
    %cst = arith.constant dense<0.000000e+00> : vector<8x16xf32>
    %10 = tpu.matmul %7, %9, %cst {dimension_numbers = #tpu.dot_dimension_numbers<[1], [0], [0], [1], [0, 0, 1, 1], [], []>} : vector<8x32xbf16>, vector<32x16xbf16>, vector<8x16xf32> -> vector<8x16xf32>
    %c0_5 = arith.constant 0 : index
    %11 = arith.index_cast %1 : i32 to index
    %c0_6 = arith.constant 0 : index
    %12 = vector.load %arg4[%c0_5, %11, %c0_6] : memref<1x16x6xf32, #tpu.memory_space<vmem>>, vector<1x8x6xf32>
    %13 = vector.shape_cast %12 : vector<1x8x6xf32> to vector<8x6xf32>
    %c0_7 = arith.constant 0 : index
    %c0_8 = arith.constant 0 : index
    %c0_9 = arith.constant 0 : index
    %14 = vector.load %arg5[%c0_7, %c0_8, %c0_9] : memref<1x6x16xf32, #tpu.memory_space<vmem>>, vector<1x6x16xf32>
    %15 = vector.shape_cast %14 : vector<1x6x16xf32> to vector<6x16xf32>
    %16 = vector.extract_strided_slice %13 {offsets = [0, 0], sizes = [8, 1], strides = [1, 1]} : vector<8x6xf32> to vector<8x1xf32>
    %17 = vector.extract_strided_slice %13 {offsets = [0, 1], sizes = [8, 1], strides = [1, 1]} : vector<8x6xf32> to vector<8x1xf32>
    %18 = vector.extract_strided_slice %13 {offsets = [0, 2], sizes = [8, 1], strides = [1, 1]} : vector<8x6xf32> to vector<8x1xf32>
    %19 = vector.extract_strided_slice %13 {offsets = [0, 3], sizes = [8, 1], strides = [1, 1]} : vector<8x6xf32> to vector<8x1xf32>
    %20 = vector.extract_strided_slice %15 {offsets = [0, 0], sizes = [1, 16], strides = [1, 1]} : vector<6x16xf32> to vector<1x16xf32>
    %21 = vector.extract_strided_slice %15 {offsets = [1, 0], sizes = [1, 16], strides = [1, 1]} : vector<6x16xf32> to vector<1x16xf32>
    %22 = vector.extract_strided_slice %15 {offsets = [2, 0], sizes = [1, 16], strides = [1, 1]} : vector<6x16xf32> to vector<1x16xf32>
    %23 = vector.extract_strided_slice %15 {offsets = [3, 0], sizes = [1, 16], strides = [1, 1]} : vector<6x16xf32> to vector<1x16xf32>
    %24 = arith.subf %18, %16 : vector<8x1xf32>
    %25 = arith.subf %19, %17 : vector<8x1xf32>
    %26 = arith.mulf %24, %25 : vector<8x1xf32>
    %27 = arith.subf %22, %20 : vector<1x16xf32>
    %28 = arith.subf %23, %21 : vector<1x16xf32>
    %29 = arith.mulf %27, %28 : vector<1x16xf32>
    %30 = vector.broadcast %18 : vector<8x1xf32> to vector<8x16xf32>
    %31 = vector.broadcast %22 : vector<1x16xf32> to vector<8x16xf32>
    %32 = arith.minimumf %30, %31 : vector<8x16xf32>
    %33 = vector.broadcast %16 : vector<8x1xf32> to vector<8x16xf32>
    %34 = vector.broadcast %20 : vector<1x16xf32> to vector<8x16xf32>
    %35 = arith.maximumf %33, %34 : vector<8x16xf32>
    %36 = arith.subf %32, %35 : vector<8x16xf32>
    %cst_10 = arith.constant 0.000000e+00 : f32
    %37 = vector.broadcast %cst_10 : f32 to vector<8x16xf32>
    %38 = arith.maximumf %36, %37 : vector<8x16xf32>
    %39 = vector.broadcast %19 : vector<8x1xf32> to vector<8x16xf32>
    %40 = vector.broadcast %23 : vector<1x16xf32> to vector<8x16xf32>
    %41 = arith.minimumf %39, %40 : vector<8x16xf32>
    %42 = vector.broadcast %17 : vector<8x1xf32> to vector<8x16xf32>
    %43 = vector.broadcast %21 : vector<1x16xf32> to vector<8x16xf32>
    %44 = arith.maximumf %42, %43 : vector<8x16xf32>
    %45 = arith.subf %41, %44 : vector<8x16xf32>
    %cst_11 = arith.constant 0.000000e+00 : f32
    %46 = vector.broadcast %cst_11 : f32 to vector<8x16xf32>
    %47 = arith.maximumf %45, %46 : vector<8x16xf32>
    %48 = arith.mulf %38, %47 : vector<8x16xf32>
    %cst_12 = arith.constant 9.99999997E-7 : f32
    %49 = vector.broadcast %cst_12 : f32 to vector<8x1xf32>
    %50 = arith.addf %26, %49 : vector<8x1xf32>
    %51 = vector.broadcast %50 : vector<8x1xf32> to vector<8x16xf32>
    %52 = vector.broadcast %29 : vector<1x16xf32> to vector<8x16xf32>
    %53 = arith.addf %51, %52 : vector<8x16xf32>
    %54 = arith.subf %53, %48 : vector<8x16xf32>
    %55 = tpu.reciprocal %54 {approx = true} : vector<8x16xf32> -> vector<8x16xf32>
    %56 = arith.mulf %48, %55 : vector<8x16xf32>
    %cst_13 = arith.constant 9.99999997E-7 : f32
    %57 = vector.broadcast %cst_13 : f32 to vector<8x1xf32>
    %58 = arith.addf %26, %57 : vector<8x1xf32>
    %59 = tpu.reciprocal %58 {approx = true} : vector<8x1xf32> -> vector<8x1xf32>
    %60 = vector.broadcast %59 : vector<8x1xf32> to vector<8x16xf32>
    %61 = arith.mulf %48, %60 : vector<8x16xf32>
    %cst_14 = arith.constant 9.99999997E-7 : f32
    %62 = vector.broadcast %cst_14 : f32 to vector<1x16xf32>
    %63 = arith.addf %29, %62 : vector<1x16xf32>
    %64 = tpu.reciprocal %63 {approx = true} : vector<1x16xf32> -> vector<1x16xf32>
    %65 = vector.broadcast %64 : vector<1x16xf32> to vector<8x16xf32>
    %66 = arith.mulf %48, %65 : vector<8x16xf32>
    %67 = arith.index_cast %1 : i32 to index
    %c0_15 = arith.constant 0 : index
    %68 = vector.load %arg25[%67, %c0_15] : memref<16x16xf32, #tpu.memory_space<vmem>>, vector<8x16xf32>
    tpu.vector_store %arg25[%67, %c0_15], %10 {strides = array<i32>} : memref<16x16xf32, #tpu.memory_space<vmem>>, vector<8x16xf32>,
    %69 = arith.index_cast %1 : i32 to index
    %c0_16 = arith.constant 0 : index
    %70 = vector.load %arg26[%69, %c0_16] : memref<16x16xf32, #tpu.memory_space<vmem>>, vector<8x16xf32>
    tpu.vector_store %arg26[%69, %c0_16], %56 {strides = array<i32>} : memref<16x16xf32, #tpu.memory_space<vmem>>, vector<8x16xf32>,
    %71 = arith.index_cast %1 : i32 to index
    %c0_17 = arith.constant 0 : index
    %72 = vector.load %arg27[%71, %c0_17] : memref<16x16xf32, #tpu.memory_space<vmem>>, vector<8x16xf32>
    tpu.vector_store %arg27[%71, %c0_17], %61 {strides = array<i32>} : memref<16x16xf32, #tpu.memory_space<vmem>>, vector<8x16xf32>,
    %73 = arith.index_cast %1 : i32 to index
    %c0_18 = arith.constant 0 : index
    %74 = vector.load %arg28[%73, %c0_18] : memref<16x16xf32, #tpu.memory_space<vmem>>, vector<8x16xf32>
    tpu.vector_store %arg28[%73, %c0_18], %66 {strides = array<i32>} : memref<16x16xf32, #tpu.memory_space<vmem>>, vector<8x16xf32>,
    %75 = vector.shape_cast %10 : vector<8x16xf32> to vector<8x16x1xf32>
    %76 = vector.shape_cast %56 : vector<8x16xf32> to vector<8x16x1xf32>
    %77 = vector.shape_cast %61 : vector<8x16xf32> to vector<8x16x1xf32>
    %78 = vector.shape_cast %66 : vector<8x16xf32> to vector<8x16x1xf32>
    %79 = tpu.concatenate %75, %76, %77, %78 in 2 : vector<8x16x1xf32>, vector<8x16x1xf32>, vector<8x16x1xf32>, vector<8x16x1xf32> -> vector<8x16x4xf32>
    %80 = vector.shape_cast %79 : vector<8x16x4xf32> to vector<128x4xf32>
    %c0_19 = arith.constant 0 : index
    %c0_20 = arith.constant 0 : index
    %81 = vector.load %arg12[%c0_19, %c0_20] : memref<4x256xf32, #tpu.memory_space<vmem>>, vector<4x256xf32>
    %82 = vector.extract_strided_slice %81 {offsets = [0, 0], sizes = [4, 128], strides = [1, 1]} : vector<4x256xf32> to vector<4x128xf32>
    %cst_21 = arith.constant dense<0.000000e+00> : vector<128x128xf32>
    %83 = tpu.matmul %80, %82, %cst_21 {dimension_numbers = #tpu.dot_dimension_numbers<[1], [0], [0], [1], [0, 0, 1, 1], [], []>} : vector<128x4xf32>, vector<4x128xf32>, vector<128x128xf32> -> vector<128x128xf32>
    %84 = vector.shape_cast %83 : vector<128x128xf32> to vector<8x16x128xf32>
    %85 = arith.index_cast %1 : i32 to index
    %c0_22 = arith.constant 0 : index
    %86 = vector.load %arg22[%85, %c0_22] : memref<16x256xf32, #tpu.memory_space<vmem>>, vector<8x256xf32>
    %87 = vector.extract_strided_slice %86 {offsets = [0, 0], sizes = [8, 128], strides = [1, 1]} : vector<8x256xf32> to vector<8x128xf32>
    %c0_23 = arith.constant 0 : index
    %c0_24 = arith.constant 0 : index
    %88 = vector.load %arg23[%c0_23, %c0_24] : memref<16x256xf32, #tpu.memory_space<vmem>>, vector<16x256xf32>
    %89 = vector.extract_strided_slice %88 {offsets = [0, 0], sizes = [16, 128], strides = [1, 1]} : vector<16x256xf32> to vector<16x128xf32>
    %90 = vector.shape_cast %87 : vector<8x128xf32> to vector<8x1x128xf32>
    %91 = vector.shape_cast %89 : vector<16x128xf32> to vector<1x16x128xf32>
    %92 = vector.broadcast %90 : vector<8x1x128xf32> to vector<8x16x128xf32>
    %93 = vector.broadcast %91 : vector<1x16x128xf32> to vector<8x16x128xf32>
    %94 = arith.addf %92, %93 : vector<8x16x128xf32>
    %95 = arith.addf %94, %84 : vector<8x16x128xf32>
    %cst_25 = arith.constant 0.000000e+00 : f32
    %96 = vector.broadcast %cst_25 : f32 to vector<8x16x128xf32>
    %97 = arith.maximumf %95, %96 : vector<8x16x128xf32>
    %c0_26 = arith.constant 0 : index
    %c0_27 = arith.constant 0 : index
    %98 = vector.load %arg14[%c0_26, %c0_27] : memref<1x128xf32, #tpu.memory_space<vmem>>, vector<1x128xf32>
    %99 = vector.shape_cast %98 : vector<1x128xf32> to vector<1x1x128xf32>
    %100 = vector.broadcast %99 : vector<1x1x128xf32> to vector<8x16x128xf32>
    %101 = arith.mulf %97, %100 : vector<8x16x128xf32>
    %cst_28 = arith.constant dense<0.000000e+00> : vector<8x16xf32>
    %102 = vector.multi_reduction <add>, %101, %cst_28 [2] : vector<8x16x128xf32> to vector<8x16xf32>
    %c0_29 = arith.constant 0 : index
    %c0_30 = arith.constant 0 : index
    %103 = vector.load %arg15[%c0_29, %c0_30] : memref<1x1xf32, #tpu.memory_space<vmem>>, vector<1x1xf32>
    %104 = vector.broadcast %103 : vector<1x1xf32> to vector<8x16xf32>
    %105 = arith.addf %102, %104 : vector<8x16xf32>
    %106 = arith.index_cast %1 : i32 to index
    %c0_31 = arith.constant 0 : index
    %107 = vector.load %arg24[%106, %c0_31] : memref<16x16xf32, #tpu.memory_space<vmem>>, vector<8x16xf32>
    tpu.vector_store %arg24[%106, %c0_31], %105 {strides = array<i32>} : memref<16x16xf32, #tpu.memory_space<vmem>>, vector<8x16xf32>,
    %c1_i32 = arith.constant 1 : i32
    %108 = arith.cmpi eq, %arg1, %c1_i32 : i32
    %109 = arith.extui %108 : i1 to i32
    %c0_i32_32 = arith.constant 0 : i32
    %110 = arith.cmpi ne, %109, %c0_i32_32 : i32
    scf.if %110 {
      %c0_33 = arith.constant 0 : index
      %c0_34 = arith.constant 0 : index
      %111 = vector.load %arg24[%c0_33, %c0_34] : memref<16x16xf32, #tpu.memory_space<vmem>>, vector<16x16xf32>
      %cst_35 = arith.constant dense<0xFF800000> : vector<16xf32>
      %112 = vector.multi_reduction <maximumf>, %111, %cst_35 [1] : vector<16x16xf32> to vector<16xf32>
      %113 = vector.shape_cast %112 : vector<16xf32> to vector<16x1xf32>
      %114 = tpu.iota {dimensions = array<i32: 1>} : vector<16x16xi32>
      %115 = vector.broadcast %113 : vector<16x1xf32> to vector<16x16xf32>
      %116 = arith.cmpf oeq, %111, %115 : vector<16x16xf32>
      %c16_i32 = arith.constant 16 : i32
      %117 = vector.broadcast %c16_i32 : i32 to vector<16x16xi32>
      %118 = arith.select %116, %114, %117 : vector<16x16xi1>, vector<16x16xi32>
      %cst_36 = arith.constant dense<2147483647> : vector<16xi32>
      %119 = vector.multi_reduction <minsi>, %118, %cst_36 [1] : vector<16x16xi32> to vector<16xi32>
      %120 = vector.shape_cast %119 : vector<16xi32> to vector<16x1xi32>
      %121 = vector.broadcast %120 : vector<16x1xi32> to vector<16x16xi32>
      %122 = arith.cmpi eq, %114, %121 : vector<16x16xi32>
      %123 = arith.extui %122 : vector<16x16xi1> to vector<16x16xi32>
      %124 = arith.sitofp %123 : vector<16x16xi32> to vector<16x16xf32>
      %c0_37 = arith.constant 0 : index
      %c0_38 = arith.constant 0 : index
      %c0_39 = arith.constant 0 : index
      %125 = vector.load %arg20[%c0_37, %c0_38, %c0_39] : memref<1x16x1xf32, #tpu.memory_space<vmem>>, vector<1x16x1xf32>
      %126 = vector.shape_cast %125 : vector<1x16x1xf32> to vector<16x1xf32>
      %127 = vector.shape_cast %113 : vector<16x1xf32> to vector<1x16x1xf32>
      tpu.vector_store %arg20[%c0_37, %c0_38, %c0_39], %127 {strides = array<i32>} : memref<1x16x1xf32, #tpu.memory_space<vmem>>, vector<1x16x1xf32>,
      %c0_40 = arith.constant 0 : index
      %c0_41 = arith.constant 0 : index
      %128 = vector.load %arg22[%c0_40, %c0_41] : memref<16x256xf32, #tpu.memory_space<vmem>>, vector<16x256xf32>
      %129 = vector.extract_strided_slice %128 {offsets = [0, 128], sizes = [16, 128], strides = [1, 1]} : vector<16x256xf32> to vector<16x128xf32>
      %c0_42 = arith.constant 0 : index
      %c0_43 = arith.constant 0 : index
      %130 = vector.load %arg23[%c0_42, %c0_43] : memref<16x256xf32, #tpu.memory_space<vmem>>, vector<16x256xf32>
      %131 = vector.extract_strided_slice %130 {offsets = [0, 128], sizes = [16, 128], strides = [1, 1]} : vector<16x256xf32> to vector<16x128xf32>
      %cst_44 = arith.constant dense<0.000000e+00> : vector<16x128xf32>
      %132 = tpu.matmul %124, %131, %cst_44 {dimension_numbers = #tpu.dot_dimension_numbers<[1], [0], [0], [1], [0, 0, 1, 1], [], []>} : vector<16x16xf32>, vector<16x128xf32>, vector<16x128xf32> -> vector<16x128xf32>
      %c0_45 = arith.constant 0 : index
      %c0_46 = arith.constant 0 : index
      %133 = vector.load %arg25[%c0_45, %c0_46] : memref<16x16xf32, #tpu.memory_space<vmem>>, vector<16x16xf32>
      %134 = arith.mulf %124, %133 : vector<16x16xf32>
      %cst_47 = arith.constant dense<0.000000e+00> : vector<16xf32>
      %135 = vector.multi_reduction <add>, %134, %cst_47 [1] : vector<16x16xf32> to vector<16xf32>
      %136 = vector.shape_cast %135 : vector<16xf32> to vector<16x1xf32>
      %c0_48 = arith.constant 0 : index
      %c0_49 = arith.constant 0 : index
      %137 = vector.load %arg26[%c0_48, %c0_49] : memref<16x16xf32, #tpu.memory_space<vmem>>, vector<16x16xf32>
      %138 = arith.mulf %124, %137 : vector<16x16xf32>
      %cst_50 = arith.constant dense<0.000000e+00> : vector<16xf32>
      %139 = vector.multi_reduction <add>, %138, %cst_50 [1] : vector<16x16xf32> to vector<16xf32>
      %140 = vector.shape_cast %139 : vector<16xf32> to vector<16x1xf32>
      %c0_51 = arith.constant 0 : index
      %c0_52 = arith.constant 0 : index
      %141 = vector.load %arg27[%c0_51, %c0_52] : memref<16x16xf32, #tpu.memory_space<vmem>>, vector<16x16xf32>
      %142 = arith.mulf %124, %141 : vector<16x16xf32>
      %cst_53 = arith.constant dense<0.000000e+00> : vector<16xf32>
      %143 = vector.multi_reduction <add>, %142, %cst_53 [1] : vector<16x16xf32> to vector<16xf32>
      %144 = vector.shape_cast %143 : vector<16xf32> to vector<16x1xf32>
      %c0_54 = arith.constant 0 : index
      %c0_55 = arith.constant 0 : index
      %145 = vector.load %arg28[%c0_54, %c0_55] : memref<16x16xf32, #tpu.memory_space<vmem>>, vector<16x16xf32>
      %146 = arith.mulf %124, %145 : vector<16x16xf32>
      %cst_56 = arith.constant dense<0.000000e+00> : vector<16xf32>
      %147 = vector.multi_reduction <add>, %146, %cst_56 [1] : vector<16x16xf32> to vector<16xf32>
      %148 = vector.shape_cast %147 : vector<16xf32> to vector<16x1xf32>
      %149 = tpu.concatenate %136, %140, %144, %148 in 1 : vector<16x1xf32>, vector<16x1xf32>, vector<16x1xf32>, vector<16x1xf32> -> vector<16x4xf32>
      %c0_57 = arith.constant 0 : index
      %c0_58 = arith.constant 0 : index
      %150 = vector.load %arg12[%c0_57, %c0_58] : memref<4x256xf32, #tpu.memory_space<vmem>>, vector<4x256xf32>
      %151 = vector.extract_strided_slice %150 {offsets = [0, 128], sizes = [4, 128], strides = [1, 1]} : vector<4x256xf32> to vector<4x128xf32>
      %cst_59 = arith.constant dense<0.000000e+00> : vector<16x128xf32>
      %152 = tpu.matmul %149, %151, %cst_59 {dimension_numbers = #tpu.dot_dimension_numbers<[1], [0], [0], [1], [0, 0, 1, 1], [], []>} : vector<16x4xf32>, vector<4x128xf32>, vector<16x128xf32> -> vector<16x128xf32>
      %153 = arith.addf %129, %132 : vector<16x128xf32>
      %154 = arith.addf %153, %152 : vector<16x128xf32>
      %cst_60 = arith.constant 0.000000e+00 : f32
      %155 = vector.broadcast %cst_60 : f32 to vector<16x128xf32>
      %156 = arith.maximumf %154, %155 : vector<16x128xf32>
      %157 = arith.truncf %156 : vector<16x128xf32> to vector<16x128xbf16>
      %c0_61 = arith.constant 0 : index
      %c0_62 = arith.constant 0 : index
      %158 = vector.load %arg16[%c0_61, %c0_62] : memref<128x128xbf16, #tpu.memory_space<vmem>>, vector<128x128xbf16>
      %cst_63 = arith.constant dense<0.000000e+00> : vector<16x128xf32>
      %159 = tpu.matmul %157, %158, %cst_63 {dimension_numbers = #tpu.dot_dimension_numbers<[1], [0], [0], [1], [0, 0, 1, 1], [], []>} : vector<16x128xbf16>, vector<128x128xbf16>, vector<16x128xf32> -> vector<16x128xf32>
      %c0_64 = arith.constant 0 : index
      %c0_65 = arith.constant 0 : index
      %160 = vector.load %arg17[%c0_64, %c0_65] : memref<1x128xf32, #tpu.memory_space<vmem>>, vector<1x128xf32>
      %161 = vector.broadcast %160 : vector<1x128xf32> to vector<16x128xf32>
      %162 = arith.addf %159, %161 : vector<16x128xf32>
      %cst_66 = arith.constant 0.000000e+00 : f32
      %163 = vector.broadcast %cst_66 : f32 to vector<16x128xf32>
      %164 = arith.maximumf %162, %163 : vector<16x128xf32>
      %165 = arith.truncf %164 : vector<16x128xf32> to vector<16x128xbf16>
      %c0_67 = arith.constant 0 : index
      %c0_68 = arith.constant 0 : index
      %166 = vector.load %arg18[%c0_67, %c0_68] : memref<128x2xbf16, #tpu.memory_space<vmem>>, vector<128x2xbf16>
      %cst_69 = arith.constant dense<0.000000e+00> : vector<16x2xf32>
      %167 = tpu.matmul %165, %166, %cst_69 {dimension_numbers = #tpu.dot_dimension_numbers<[1], [0], [0], [1], [0, 0, 1, 1], [], []>} : vector<16x128xbf16>, vector<128x2xbf16>, vector<16x2xf32> -> vector<16x2xf32>
      %c0_70 = arith.constant 0 : index
      %c0_71 = arith.constant 0 : index
      %168 = vector.load %arg19[%c0_70, %c0_71] : memref<1x2xf32, #tpu.memory_space<vmem>>, vector<1x2xf32>
      %169 = vector.broadcast %168 : vector<1x2xf32> to vector<16x2xf32>
      %170 = arith.addf %167, %169 : vector<16x2xf32>
      %c0_72 = arith.constant 0 : index
      %c0_73 = arith.constant 0 : index
      %c0_74 = arith.constant 0 : index
      %171 = vector.load %arg21[%c0_72, %c0_73, %c0_74] : memref<1x16x2xf32, #tpu.memory_space<vmem>>, vector<1x16x2xf32>
      %172 = vector.shape_cast %171 : vector<1x16x2xf32> to vector<16x2xf32>
      %173 = vector.shape_cast %170 : vector<16x2xf32> to vector<1x16x2xf32>
      tpu.vector_store %arg21[%c0_72, %c0_73, %c0_74], %173 {strides = array<i32>} : memref<1x16x2xf32, #tpu.memory_space<vmem>>, vector<1x16x2xf32>,
    } else {
    }
    return
  }
  func.func @transform_0(%arg0: i32, %arg1: i32) -> (i32, i32, i32) {
    %c0_i32 = arith.constant 0 : i32
    %c0_i32_0 = arith.constant 0 : i32
    %c0_i32_1 = arith.constant 0 : i32
    return %arg0, %c0_i32, %c0_i32_0 : i32, i32, i32
  }
  func.func @transform_1(%arg0: i32, %arg1: i32) -> (i32, i32, i32) {
    %c0_i32 = arith.constant 0 : i32
    %c0_i32_0 = arith.constant 0 : i32
    %c0_i32_1 = arith.constant 0 : i32
    return %arg0, %c0_i32, %c0_i32_0 : i32, i32, i32
  }
  func.func @transform_2(%arg0: i32, %arg1: i32) -> (i32, i32, i32) {
    %c0_i32 = arith.constant 0 : i32
    %c0_i32_0 = arith.constant 0 : i32
    %c0_i32_1 = arith.constant 0 : i32
    return %arg0, %c0_i32, %c0_i32_0 : i32, i32, i32
  }
  func.func @transform_3(%arg0: i32, %arg1: i32) -> (i32, i32, i32) {
    %c0_i32 = arith.constant 0 : i32
    %c0_i32_0 = arith.constant 0 : i32
    %c0_i32_1 = arith.constant 0 : i32
    return %arg0, %c0_i32, %c0_i32_0 : i32, i32, i32
  }
  func.func @transform_4(%arg0: i32, %arg1: i32) -> (i32, i32, i32) {
    %c0_i32 = arith.constant 0 : i32
    %c0_i32_0 = arith.constant 0 : i32
    %c0_i32_1 = arith.constant 0 : i32
    return %arg0, %c0_i32, %c0_i32_0 : i32, i32, i32
  }
  func.func @transform_5(%arg0: i32, %arg1: i32) -> (i32, i32) {
    %c0_i32 = arith.constant 0 : i32
    %c0_i32_0 = arith.constant 0 : i32
    %c0_i32_1 = arith.constant 0 : i32
    return %c0_i32, %c0_i32_0 : i32, i32
  }
  func.func @transform_6(%arg0: i32, %arg1: i32) -> (i32, i32) {
    %c0_i32 = arith.constant 0 : i32
    %c0_i32_0 = arith.constant 0 : i32
    %c0_i32_1 = arith.constant 0 : i32
    return %c0_i32, %c0_i32_0 : i32, i32
  }
  func.func @transform_7(%arg0: i32, %arg1: i32) -> (i32, i32) {
    %c0_i32 = arith.constant 0 : i32
    %c0_i32_0 = arith.constant 0 : i32
    %c0_i32_1 = arith.constant 0 : i32
    return %c0_i32, %c0_i32_0 : i32, i32
  }
  func.func @transform_8(%arg0: i32, %arg1: i32) -> (i32, i32) {
    %c0_i32 = arith.constant 0 : i32
    %c0_i32_0 = arith.constant 0 : i32
    %c0_i32_1 = arith.constant 0 : i32
    return %c0_i32, %c0_i32_0 : i32, i32
  }
  func.func @transform_9(%arg0: i32, %arg1: i32) -> (i32, i32) {
    %c0_i32 = arith.constant 0 : i32
    %c0_i32_0 = arith.constant 0 : i32
    %c0_i32_1 = arith.constant 0 : i32
    return %c0_i32, %c0_i32_0 : i32, i32
  }
  func.func @transform_10(%arg0: i32, %arg1: i32) -> (i32, i32) {
    %c0_i32 = arith.constant 0 : i32
    %c0_i32_0 = arith.constant 0 : i32
    %c0_i32_1 = arith.constant 0 : i32
    return %c0_i32, %c0_i32_0 : i32, i32
  }
  func.func @transform_11(%arg0: i32, %arg1: i32) -> (i32, i32) {
    %c0_i32 = arith.constant 0 : i32
    %c0_i32_0 = arith.constant 0 : i32
    %c0_i32_1 = arith.constant 0 : i32
    return %c0_i32, %c0_i32_0 : i32, i32
  }
  func.func @transform_12(%arg0: i32, %arg1: i32) -> (i32, i32) {
    %c0_i32 = arith.constant 0 : i32
    %c0_i32_0 = arith.constant 0 : i32
    %c0_i32_1 = arith.constant 0 : i32
    return %c0_i32, %c0_i32_0 : i32, i32
  }
  func.func @transform_13(%arg0: i32, %arg1: i32) -> (i32, i32) {
    %c0_i32 = arith.constant 0 : i32
    %c0_i32_0 = arith.constant 0 : i32
    %c0_i32_1 = arith.constant 0 : i32
    return %c0_i32, %c0_i32_0 : i32, i32
  }
  func.func @transform_14(%arg0: i32, %arg1: i32) -> (i32, i32) {
    %c0_i32 = arith.constant 0 : i32
    %c0_i32_0 = arith.constant 0 : i32
    %c0_i32_1 = arith.constant 0 : i32
    return %c0_i32, %c0_i32_0 : i32, i32
  }
  func.func @transform_15(%arg0: i32, %arg1: i32) -> (i32, i32) {
    %c0_i32 = arith.constant 0 : i32
    %c0_i32_0 = arith.constant 0 : i32
    %c0_i32_1 = arith.constant 0 : i32
    return %c0_i32, %c0_i32_0 : i32, i32
  }
  func.func @transform_16(%arg0: i32, %arg1: i32) -> (i32, i32) {
    %c0_i32 = arith.constant 0 : i32
    %c0_i32_0 = arith.constant 0 : i32
    %c0_i32_1 = arith.constant 0 : i32
    return %c0_i32, %c0_i32_0 : i32, i32
  }
  func.func @transform_17(%arg0: i32, %arg1: i32) -> (i32, i32) {
    %c0_i32 = arith.constant 0 : i32
    %c0_i32_0 = arith.constant 0 : i32
    %c0_i32_1 = arith.constant 0 : i32
    return %c0_i32, %c0_i32_0 : i32, i32
  }
  func.func @transform_18(%arg0: i32, %arg1: i32) -> (i32, i32, i32) {
    %c0_i32 = arith.constant 0 : i32
    %c0_i32_0 = arith.constant 0 : i32
    %c0_i32_1 = arith.constant 0 : i32
    return %arg0, %c0_i32, %c0_i32_0 : i32, i32, i32
  }
  func.func @transform_19(%arg0: i32, %arg1: i32) -> (i32, i32, i32) {
    %c0_i32 = arith.constant 0 : i32
    %c0_i32_0 = arith.constant 0 : i32
    %c0_i32_1 = arith.constant 0 : i32
    return %arg0, %c0_i32, %c0_i32_0 : i32, i32, i32
  }
}

</mosaic_0001>

<llo_original>
// kernel: tpu_custom_call.1
$region0: #{tpu_custom_call.1}
  #allocation0 [shape = 'u32[]', space=smem, size = 0x4, offset = 0x4, fixed_abs, tag = 'smem constant byte address 0x4 - core index']
  #allocation1 [shape = 'u32[72,128]{1,0:T(1,128)}', space=vmem, size = 0x9000, scoped, tag = 'internal scratch']
  #allocation2 [shape = 'f32[16,256]{1,0:T(8,128)}', space=vmem, size = 0x4000, scoped, tag = 'scratch operand']
  #allocation3 [shape = 'f32[16,256]{1,0:T(8,128)}', space=vmem, size = 0x4000, scoped, tag = 'scratch operand']
  #allocation4 [shape = 'f32[16,16]{1,0:T(8,128)}', space=vmem, size = 0x2000, scoped, tag = 'scratch operand']
  #allocation5 [shape = 'f32[16,16]{1,0:T(8,128)}', space=vmem, size = 0x2000, scoped, tag = 'scratch operand']
  #allocation6 [shape = 'f32[16,16]{1,0:T(8,128)}', space=vmem, size = 0x2000, scoped, tag = 'scratch operand']
  #allocation7 [shape = 'f32[16,16]{1,0:T(8,128)}', space=vmem, size = 0x2000, scoped, tag = 'scratch operand']
  #allocation8 [shape = 'f32[16,16]{1,0:T(8,128)}', space=vmem, size = 0x2000, scoped, tag = 'scratch operand']
  #allocation9 [shape = 'f32[1,1]{1,0:T(1,128)S(1)}', space=vmem, size = 0x200, scoped, tag = 'scoped memory for tpu_custom_call.1']
  %s0 = inlined_call_operand.vmem [shape: bf16[2,16,32], index: 0, kind: input, shape index: {}]
  %s1 = inlined_call_operand.vmem [shape: bf16[2,32,16], index: 1, kind: input, shape index: {}]
  %s2 = inlined_call_operand.vmem [shape: f32[2,16,6], index: 2, kind: input, shape index: {}]
  %s3 = inlined_call_operand.vmem [shape: f32[2,6,16], index: 3, kind: input, shape index: {}]
  %s4 = inlined_call_operand.hbm [shape: f32[2,1,32], index: 4, kind: input, shape index: {}]
  %s5 = inlined_call_operand.hbm [shape: bf16[32,256], index: 5, kind: input, shape index: {}]
  %s6 = inlined_call_operand.hbm [shape: bf16[32,256], index: 6, kind: input, shape index: {}]
  %s7 = inlined_call_operand.vmem [shape: f32[32,256], index: 7, kind: input, shape index: {}]
  %s8 = inlined_call_operand.vmem [shape: f32[6,256], index: 8, kind: input, shape index: {}]
  %s9 = inlined_call_operand.hbm [shape: f32[6,256], index: 9, kind: input, shape index: {}]
  %s10 = inlined_call_operand.hbm [shape: f32[4,256], index: 10, kind: input, shape index: {}]
  %s11 = inlined_call_operand.vmem [shape: f32[1,256], index: 11, kind: input, shape index: {}]
  %s12 = inlined_call_operand.vmem [shape: f32[1,128], index: 12, kind: input, shape index: {}]
  %s13 = inlined_call_operand.<no memory space> [shape: f32[1,1], index: 13, kind: input, shape index: {}]
  %s14 = inlined_call_operand.vmem [shape: bf16[128,128], index: 14, kind: input, shape index: {}]
  %s15 = inlined_call_operand.vmem [shape: f32[1,128], index: 15, kind: input, shape index: {}]
  %s16 = inlined_call_operand.vmem [shape: bf16[128,2], index: 16, kind: input, shape index: {}]
  %s17 = inlined_call_operand.vmem [shape: f32[1,2], index: 17, kind: input, shape index: {}]
  %s18 = inlined_call_operand.vmem [shape: f32[2,16,1], index: 18, kind: output, shape index: {0}]
  %s19 = inlined_call_operand.vmem [shape: f32[2,16,2], index: 19, kind: output, shape index: {1}]
  %20 = xla_tuple %s18, %s19
  %s21 = sld [smem:[#allocation0]]
  $region141: #{tpu_custom_call.1} parent=0
    _
  %s23 = ssub.s32 1, %s21
  %s24 = scalar_select 0, %s23, %s21
  %v25 = vstv %s13
  %26 = vst [vmem:[#allocation9] sm:$0x1] %v25
  $region1: #{tpu_custom_call.1} parent=0
    #allocation10 [shape = 'u8[1024]{0}', space=vmem, size = 0x400, scoped, tag = 'input window, operand 4']
    #allocation11 [shape = 's32[2]{0}', space=sflag, size = 0x8, scoped, tag = 'scoped memory for tpu_custom_call.1']
    #allocation12 [shape = 'u8[16384]{0}', space=vmem, size = 0x4000, scoped, tag = 'input window, operand 5, single buffered']
    #allocation13 [shape = 's32[1]{0}', space=sflag, size = 0x4, scoped, tag = 'scoped memory for tpu_custom_call.1']
    #allocation14 [shape = 'u8[16384]{0}', space=vmem, size = 0x4000, scoped, tag = 'input window, operand 6, single buffered']
    #allocation15 [shape = 'u8[8192]{0}', space=vmem, size = 0x2000, scoped, tag = 'input window, operand 9, single buffered']
    #allocation16 [shape = 's32[1]{0}', space=sflag, size = 0x4, scoped, tag = 'scoped memory for tpu_custom_call.1']
    #allocation17 [shape = 'u8[4096]{0}', space=vmem, size = 0x1000, scoped, tag = 'input window, operand 10, single buffered']
    %27 = vsyncpa [#allocation11], 0
    %s28 = scalar_lea.sflag [#allocation11], 1
    %29 = vsyncpa %s28, 0
    %30 = vsyncpa [#allocation13], 0
    %31 = vsyncpa [#allocation16], 0
    loop: start=0, step=1, limit=6
    $region2: #{tpu_custom_call.1} parent=1 // loop_pre_header
      _
    $region3: #{tpu_custom_call.1} parent=1 // loop_header
      %s33 = sphi 0, %s37
      %p34 = scmp.ge.s32.totalorder %s33, 6
      %s40 = sphi 0, %s52
      %s41 = sphi 0, %s48
      %s42 = sphi 0, %s40
      %s43 = sphi 0, %s41
      %s44 = sphi 0, %s42
      %s45 = sphi 0, %s43
      %s55 = sphi 0, %s57
      %s58 = sphi 0, %s55
      %s59 = sphi 0, %s58
      %s75 = sphi 0, %s59
      %s81 = sphi 0, %s83
      %s84 = sphi 0, %s81
      %s85 = sphi 0, %s84
      %s101 = sphi 0, %s85
      %s107 = sphi 0, %s109
      %s110 = sphi 0, %s107
      %s111 = sphi 0, %s110
      %s127 = sphi 0, %s111
      %s133 = sphi 0, %s135
      %s136 = sphi 0, %s133
      %s137 = sphi 0, %s136
      %s153 = sphi 0, %s137
      %s159 = sphi 0, %s161
      %s162 = sphi 0, %s159
      %s163 = sphi 0, %s162
      %s179 = sphi 0, %s163
      %s183 = sphi 0, %s183
      %s185 = sphi 0, %s183
      %s186 = sphi 0, %s185
      %s200 = sphi 0, %s186
      %s204 = sphi 0, %s204
      %s206 = sphi 0, %s204
      %s207 = sphi 0, %s206
      %s221 = sphi 0, %s207
      %s225 = sphi 0, %s225
      %s227 = sphi 0, %s225
      %s228 = sphi 0, %s227
      %s242 = sphi 0, %s228
      %s246 = sphi 0, %s246
      %s248 = sphi 0, %s246
      %s249 = sphi 0, %s248
      %s263 = sphi 0, %s249
      %s267 = sphi 0, %s267
      %s269 = sphi 0, %s267
      %s270 = sphi 0, %s269
      %s284 = sphi 0, %s270
      %s288 = sphi 0, %s288
      %s290 = sphi 0, %s288
      %s291 = sphi 0, %s290
      %s305 = sphi 0, %s291
      %s309 = sphi 0, %s309
      %s311 = sphi 0, %s309
      %s312 = sphi 0, %s311
      %s326 = sphi 0, %s312
      %s330 = sphi 0, %s330
      %s332 = sphi 0, %s330
      %s333 = sphi 0, %s332
      %s347 = sphi 0, %s333
      %s351 = sphi 0, %s351
      %s353 = sphi 0, %s351
      %s354 = sphi 0, %s353
      %s368 = sphi 0, %s354
      %s372 = sphi 0, %s372
      %s374 = sphi 0, %s372
      %s375 = sphi 0, %s374
      %s389 = sphi 0, %s375
      %s393 = sphi 0, %s393
      %s395 = sphi 0, %s393
      %s396 = sphi 0, %s395
      %s410 = sphi 0, %s396
      %s414 = sphi 0, %s414
      %s416 = sphi 0, %s414
      %s417 = sphi 0, %s416
      %s431 = sphi 0, %s417
      %s435 = sphi 0, %s435
      %s437 = sphi 0, %s435
      %s438 = sphi 0, %s437
      %s452 = sphi 0, %s438
      %s458 = sphi 0, %s460
      %s461 = sphi 0, %s458
      %s462 = sphi 0, %s461
      %s478 = sphi 0, %s462
      %s484 = sphi 0, %s486
      %s487 = sphi 0, %s484
      %s488 = sphi 0, %s487
      %s504 = sphi 0, %s488
    $region4: #{tpu_custom_call.1} parent=1 // loop_header_branch
      %36 = sbr.rel (%p34) target = $region8
    $region5: #{tpu_custom_call.1} parent=1 // loop_body
      %s38 = ssub.s32 %s33, 1
      %s39 = ssub.s32 %s33, 2
      %s46 = sadd.s32 1, %s41
      %p47 = scmp.ge.s32.totalorder %s46, 2
      %s48 = scalar_select %p47, 0, %s46
      %s49 = sadd.s32 1, %s40
      %s50 = scalar_select %p47, %s49, %s40
      %p51 = scmp.ge.s32.totalorder %s50, 2
      %s52 = scalar_select %p51, 0, %s50
      %s53 = ssub.s32 %s40, %s52
      %p54 = scmp.eq.s32.totalorder %s53, 0
      %s56 = sadd.s32 %s55, 1
      %s57 = scalar_select %p54, %s55, %s56
      %p60 = pneg %p54
      %p61 = scmp.eq.s32.totalorder %s33, 3
      %p62 = por %p60, %p61
      %p63 = scmp.ne.s32.totalorder %s55, %s58
      %p64 = scmp.eq.s32.totalorder %s33, 0
      %p65 = por %p63, %p64
      %p66 = scmp.ne.s32.totalorder %s55, %s58
      %p67 = scmp.eq.s32.totalorder %s38, 3
      %p68 = por %p66, %p67
      %p69 = scmp.ne.s32.totalorder %s58, %s59
      %p70 = scmp.eq.s32.totalorder %s38, 0
      %p71 = por %p69, %p70
      %p72 = scmp.ne.s32.totalorder %s58, %s59
      %p73 = scmp.eq.s32.totalorder %s39, 3
      %p74 = por %p72, %p73
      %p76 = scmp.ne.s32.totalorder %s59, %s75
      %p77 = scmp.eq.s32.totalorder %s39, 0
      %p78 = por %p76, %p77
      %s79 = ssub.s32 %s40, %s52
      %p80 = scmp.eq.s32.totalorder %s79, 0
      %s82 = sadd.s32 %s81, 1
      %s83 = scalar_select %p80, %s81, %s82
      %p86 = pneg %p80
      %p87 = scmp.eq.s32.totalorder %s33, 3
      %p88 = por %p86, %p87
      %p89 = scmp.ne.s32.totalorder %s81, %s84
      %p90 = scmp.eq.s32.totalorder %s33, 0
      %p91 = por %p89, %p90
      %p92 = scmp.ne.s32.totalorder %s81, %s84
      %p93 = scmp.eq.s32.totalorder %s38, 3
      %p94 = por %p92, %p93
      %p95 = scmp.ne.s32.totalorder %s84, %s85
      %p96 = scmp.eq.s32.totalorder %s38, 0
      %p97 = por %p95, %p96
      %p98 = scmp.ne.s32.totalorder %s84, %s85
      %p99 = scmp.eq.s32.totalorder %s39, 3
      %p100 = por %p98, %p99
      %p102 = scmp.ne.s32.totalorder %s85, %s101
      %p103 = scmp.eq.s32.totalorder %s39, 0
      %p104 = por %p102, %p103
      %s105 = ssub.s32 %s40, %s52
      %p106 = scmp.eq.s32.totalorder %s105, 0
      %s108 = sadd.s32 %s107, 1
      %s109 = scalar_select %p106, %s107, %s108
      %p112 = pneg %p106
      %p113 = scmp.eq.s32.totalorder %s33, 3
      %p114 = por %p112, %p113
      %p115 = scmp.ne.s32.totalorder %s107, %s110
      %p116 = scmp.eq.s32.totalorder %s33, 0
      %p117 = por %p115, %p116
      %p118 = scmp.ne.s32.totalorder %s107, %s110
      %p119 = scmp.eq.s32.totalorder %s38, 3
      %p120 = por %p118, %p119
      %p121 = scmp.ne.s32.totalorder %s110, %s111
      %p122 = scmp.eq.s32.totalorder %s38, 0
      %p123 = por %p121, %p122
      %p124 = scmp.ne.s32.totalorder %s110, %s111
      %p125 = scmp.eq.s32.totalorder %s39, 3
      %p126 = por %p124, %p125
      %p128 = scmp.ne.s32.totalorder %s111, %s127
      %p129 = scmp.eq.s32.totalorder %s39, 0
      %p130 = por %p128, %p129
      %s131 = ssub.s32 %s40, %s52
      %p132 = scmp.eq.s32.totalorder %s131, 0
      %s134 = sadd.s32 %s133, 1
      %s135 = scalar_select %p132, %s133, %s134
      %p138 = pneg %p132
      %p139 = scmp.eq.s32.totalorder %s33, 3
      %p140 = por %p138, %p139
      %p141 = scmp.ne.s32.totalorder %s133, %s136
      %p142 = scmp.eq.s32.totalorder %s33, 0
      %p143 = por %p141, %p142
      %p144 = scmp.ne.s32.totalorder %s133, %s136
      %p145 = scmp.eq.s32.totalorder %s38, 3
      %p146 = por %p144, %p145
      %p147 = scmp.ne.s32.totalorder %s136, %s137
      %p148 = scmp.eq.s32.totalorder %s38, 0
      %p149 = por %p147, %p148
      %p150 = scmp.ne.s32.totalorder %s136, %s137
      %p151 = scmp.eq.s32.totalorder %s39, 3
      %p152 = por %p150, %p151
      %p154 = scmp.ne.s32.totalorder %s137, %s153
      %p155 = scmp.eq.s32.totalorder %s39, 0
      %p156 = por %p154, %p155
      %s157 = ssub.s32 %s40, %s52
      %p158 = scmp.eq.s32.totalorder %s157, 0
      %s160 = sadd.s32 %s159, 1
      %s161 = scalar_select %p158, %s159, %s160
      %p164 = pneg %p158
      %p165 = scmp.eq.s32.totalorder %s33, 3
      %p166 = por %p164, %p165
      %p167 = scmp.ne.s32.totalorder %s159, %s162
      %p168 = scmp.eq.s32.totalorder %s33, 0
      %p169 = por %p167, %p168
      %p170 = scmp.ne.s32.totalorder %s159, %s162
      %p171 = scmp.eq.s32.totalorder %s38, 3
      %p172 = por %p170, %p171
      %p173 = scmp.ne.s32.totalorder %s162, %s163
      %p174 = scmp.eq.s32.totalorder %s38, 0
      %p175 = por %p173, %p174
      %p176 = scmp.ne.s32.totalorder %s162, %s163
      %p177 = scmp.eq.s32.totalorder %s39, 3
      %p178 = por %p176, %p177
      %p180 = scmp.ne.s32.totalorder %s163, %s179
      %p181 = scmp.eq.s32.totalorder %s39, 0
      %p182 = por %p180, %p181
      %s184 = sadd.s32 %s183, 1
      %p187 = scmp.eq.s32.totalorder %s33, 3
      %p188 = scmp.ne.s32.totalorder %s183, %s185
      %p189 = scmp.eq.s32.totalorder %s33, 0
      %p190 = por %p188, %p189
      %p191 = scmp.ne.s32.totalorder %s183, %s185
      %p192 = scmp.eq.s32.totalorder %s38, 3
      %p193 = por %p191, %p192
      %p194 = scmp.ne.s32.totalorder %s185, %s186
      %p195 = scmp.eq.s32.totalorder %s38, 0
      %p196 = por %p194, %p195
      %p197 = scmp.ne.s32.totalorder %s185, %s186
      %p198 = scmp.eq.s32.totalorder %s39, 3
      %p199 = por %p197, %p198
      %p201 = scmp.ne.s32.totalorder %s186, %s200
      %p202 = scmp.eq.s32.totalorder %s39, 0
      %p203 = por %p201, %p202
      %s205 = sadd.s32 %s204, 1
      %p208 = scmp.eq.s32.totalorder %s33, 3
      %p209 = scmp.ne.s32.totalorder %s204, %s206
      %p210 = scmp.eq.s32.totalorder %s33, 0
      %p211 = por %p209, %p210
      %p212 = scmp.ne.s32.totalorder %s204, %s206
      %p213 = scmp.eq.s32.totalorder %s38, 3
      %p214 = por %p212, %p213
      %p215 = scmp.ne.s32.totalorder %s206, %s207
      %p216 = scmp.eq.s32.totalorder %s38, 0
      %p217 = por %p215, %p216
      %p218 = scmp.ne.s32.totalorder %s206, %s207
      %p219 = scmp.eq.s32.totalorder %s39, 3
      %p220 = por %p218, %p219
      %p222 = scmp.ne.s32.totalorder %s207, %s221
      %p223 = scmp.eq.s32.totalorder %s39, 0
      %p224 = por %p222, %p223
      %s226 = sadd.s32 %s225, 1
      %p229 = scmp.eq.s32.totalorder %s33, 3
      %p230 = scmp.ne.s32.totalorder %s225, %s227
      %p231 = scmp.eq.s32.totalorder %s33, 0
      %p232 = por %p230, %p231
      %p233 = scmp.ne.s32.totalorder %s225, %s227
      %p234 = scmp.eq.s32.totalorder %s38, 3
      %p235 = por %p233, %p234
      %p236 = scmp.ne.s32.totalorder %s227, %s228
      %p237 = scmp.eq.s32.totalorder %s38, 0
      %p238 = por %p236, %p237
      %p239 = scmp.ne.s32.totalorder %s227, %s228
      %p240 = scmp.eq.s32.totalorder %s39, 3
      %p241 = por %p239, %p240
      %p243 = scmp.ne.s32.totalorder %s228, %s242
      %p244 = scmp.eq.s32.totalorder %s39, 0
      %p245 = por %p243, %p244
      %s247 = sadd.s32 %s246, 1
      %p250 = scmp.eq.s32.totalorder %s33, 3
      %p251 = scmp.ne.s32.totalorder %s246, %s248
      %p252 = scmp.eq.s32.totalorder %s33, 0
      %p253 = por %p251, %p252
      %p254 = scmp.ne.s32.totalorder %s246, %s248
      %p255 = scmp.eq.s32.totalorder %s38, 3
      %p256 = por %p254, %p255
      %p257 = scmp.ne.s32.totalorder %s248, %s249
      %p258 = scmp.eq.s32.totalorder %s38, 0
      %p259 = por %p257, %p258
      %p260 = scmp.ne.s32.totalorder %s248, %s249
      %p261 = scmp.eq.s32.totalorder %s39, 3
      %p262 = por %p260, %p261
      %p264 = scmp.ne.s32.totalorder %s249, %s263
      %p265 = scmp.eq.s32.totalorder %s39, 0
      %p266 = por %p264, %p265
      %s268 = sadd.s32 %s267, 1
      %p271 = scmp.eq.s32.totalorder %s33, 3
      %p272 = scmp.ne.s32.totalorder %s267, %s269
      %p273 = scmp.eq.s32.totalorder %s33, 0
      %p274 = por %p272, %p273
      %p275 = scmp.ne.s32.totalorder %s267, %s269
      %p276 = scmp.eq.s32.totalorder %s38, 3
      %p277 = por %p275, %p276
      %p278 = scmp.ne.s32.totalorder %s269, %s270
      %p279 = scmp.eq.s32.totalorder %s38, 0
      %p280 = por %p278, %p279
      %p281 = scmp.ne.s32.totalorder %s269, %s270
      %p282 = scmp.eq.s32.totalorder %s39, 3
      %p283 = por %p281, %p282
      %p285 = scmp.ne.s32.totalorder %s270, %s284
      %p286 = scmp.eq.s32.totalorder %s39, 0
      %p287 = por %p285, %p286
      %s289 = sadd.s32 %s288, 1
      %p292 = scmp.eq.s32.totalorder %s33, 3
      %p293 = scmp.ne.s32.totalorder %s288, %s290
      %p294 = scmp.eq.s32.totalorder %s33, 0
      %p295 = por %p293, %p294
      %p296 = scmp.ne.s32.totalorder %s288, %s290
      %p297 = scmp.eq.s32.totalorder %s38, 3
      %p298 = por %p296, %p297
      %p299 = scmp.ne.s32.totalorder %s290, %s291
      %p300 = scmp.eq.s32.totalorder %s38, 0
      %p301 = por %p299, %p300
      %p302 = scmp.ne.s32.totalorder %s290, %s291
      %p303 = scmp.eq.s32.totalorder %s39, 3
      %p304 = por %p302, %p303
      %p306 = scmp.ne.s32.totalorder %s291, %s305
      %p307 = scmp.eq.s32.totalorder %s39, 0
      %p308 = por %p306, %p307
      %s310 = sadd.s32 %s309, 1
      %p313 = scmp.eq.s32.totalorder %s33, 3
      %p314 = scmp.ne.s32.totalorder %s309, %s311
      %p315 = scmp.eq.s32.totalorder %s33, 0
      %p316 = por %p314, %p315
      %p317 = scmp.ne.s32.totalorder %s309, %s311
      %p318 = scmp.eq.s32.totalorder %s38, 3
      %p319 = por %p317, %p318
      %p320 = scmp.ne.s32.totalorder %s311, %s312
      %p321 = scmp.eq.s32.totalorder %s38, 0
      %p322 = por %p320, %p321
      %p323 = scmp.ne.s32.totalorder %s311, %s312
      %p324 = scmp.eq.s32.totalorder %s39, 3
      %p325 = por %p323, %p324
      %p327 = scmp.ne.s32.totalorder %s312, %s326
      %p328 = scmp.eq.s32.totalorder %s39, 0
      %p329 = por %p327, %p328
      %s331 = sadd.s32 %s330, 1
      %p334 = scmp.eq.s32.totalorder %s33, 3
      %p335 = scmp.ne.s32.totalorder %s330, %s332
      %p336 = scmp.eq.s32.totalorder %s33, 0
      %p337 = por %p335, %p336
      %p338 = scmp.ne.s32.totalorder %s330, %s332
      %p339 = scmp.eq.s32.totalorder %s38, 3
      %p340 = por %p338, %p339
      %p341 = scmp.ne.s32.totalorder %s332, %s333
      %p342 = scmp.eq.s32.totalorder %s38, 0
      %p343 = por %p341, %p342
      %p344 = scmp.ne.s32.totalorder %s332, %s333
      %p345 = scmp.eq.s32.totalorder %s39, 3
      %p346 = por %p344, %p345
      %p348 = scmp.ne.s32.totalorder %s333, %s347
      %p349 = scmp.eq.s32.totalorder %s39, 0
      %p350 = por %p348, %p349
      %s352 = sadd.s32 %s351, 1
      %p355 = scmp.eq.s32.totalorder %s33, 3
      %p356 = scmp.ne.s32.totalorder %s351, %s353
      %p357 = scmp.eq.s32.totalorder %s33, 0
      %p358 = por %p356, %p357
      %p359 = scmp.ne.s32.totalorder %s351, %s353
      %p360 = scmp.eq.s32.totalorder %s38, 3
      %p361 = por %p359, %p360
      %p362 = scmp.ne.s32.totalorder %s353, %s354
      %p363 = scmp.eq.s32.totalorder %s38, 0
      %p364 = por %p362, %p363
      %p365 = scmp.ne.s32.totalorder %s353, %s354
      %p366 = scmp.eq.s32.totalorder %s39, 3
      %p367 = por %p365, %p366
      %p369 = scmp.ne.s32.totalorder %s354, %s368
      %p370 = scmp.eq.s32.totalorder %s39, 0
      %p371 = por %p369, %p370
      %s373 = sadd.s32 %s372, 1
      %p376 = scmp.eq.s32.totalorder %s33, 3
      %p377 = scmp.ne.s32.totalorder %s372, %s374
      %p378 = scmp.eq.s32.totalorder %s33, 0
      %p379 = por %p377, %p378
      %p380 = scmp.ne.s32.totalorder %s372, %s374
      %p381 = scmp.eq.s32.totalorder %s38, 3
      %p382 = por %p380, %p381
      %p383 = scmp.ne.s32.totalorder %s374, %s375
      %p384 = scmp.eq.s32.totalorder %s38, 0
      %p385 = por %p383, %p384
      %p386 = scmp.ne.s32.totalorder %s374, %s375
      %p387 = scmp.eq.s32.totalorder %s39, 3
      %p388 = por %p386, %p387
      %p390 = scmp.ne.s32.totalorder %s375, %s389
      %p391 = scmp.eq.s32.totalorder %s39, 0
      %p392 = por %p390, %p391
      %s394 = sadd.s32 %s393, 1
      %p397 = scmp.eq.s32.totalorder %s33, 3
      %p398 = scmp.ne.s32.totalorder %s393, %s395
      %p399 = scmp.eq.s32.totalorder %s33, 0
      %p400 = por %p398, %p399
      %p401 = scmp.ne.s32.totalorder %s393, %s395
      %p402 = scmp.eq.s32.totalorder %s38, 3
      %p403 = por %p401, %p402
      %p404 = scmp.ne.s32.totalorder %s395, %s396
      %p405 = scmp.eq.s32.totalorder %s38, 0
      %p406 = por %p404, %p405
      %p407 = scmp.ne.s32.totalorder %s395, %s396
      %p408 = scmp.eq.s32.totalorder %s39, 3
      %p409 = por %p407, %p408
      %p411 = scmp.ne.s32.totalorder %s396, %s410
      %p412 = scmp.eq.s32.totalorder %s39, 0
      %p413 = por %p411, %p412
      %s415 = sadd.s32 %s414, 1
      %p418 = scmp.eq.s32.totalorder %s33, 3
      %p419 = scmp.ne.s32.totalorder %s414, %s416
      %p420 = scmp.eq.s32.totalorder %s33, 0
      %p421 = por %p419, %p420
      %p422 = scmp.ne.s32.totalorder %s414, %s416
      %p423 = scmp.eq.s32.totalorder %s38, 3
      %p424 = por %p422, %p423
      %p425 = scmp.ne.s32.totalorder %s416, %s417
      %p426 = scmp.eq.s32.totalorder %s38, 0
      %p427 = por %p425, %p426
      %p428 = scmp.ne.s32.totalorder %s416, %s417
      %p429 = scmp.eq.s32.totalorder %s39, 3
      %p430 = por %p428, %p429
      %p432 = scmp.ne.s32.totalorder %s417, %s431
      %p433 = scmp.eq.s32.totalorder %s39, 0
      %p434 = por %p432, %p433
      %s436 = sadd.s32 %s435, 1
      %p439 = scmp.eq.s32.totalorder %s33, 3
      %p440 = scmp.ne.s32.totalorder %s435, %s437
      %p441 = scmp.eq.s32.totalorder %s33, 0
      %p442 = por %p440, %p441
      %p443 = scmp.ne.s32.totalorder %s435, %s437
      %p444 = scmp.eq.s32.totalorder %s38, 3
      %p445 = por %p443, %p444
      %p446 = scmp.ne.s32.totalorder %s437, %s438
      %p447 = scmp.eq.s32.totalorder %s38, 0
      %p448 = por %p446, %p447
      %p449 = scmp.ne.s32.totalorder %s437, %s438
      %p450 = scmp.eq.s32.totalorder %s39, 3
      %p451 = por %p449, %p450
      %p453 = scmp.ne.s32.totalorder %s438, %s452
      %p454 = scmp.eq.s32.totalorder %s39, 0
      %p455 = por %p453, %p454
      %s456 = ssub.s32 %s40, %s52
      %p457 = scmp.eq.s32.totalorder %s456, 0
      %s459 = sadd.s32 %s458, 1
      %s460 = scalar_select %p457, %s458, %s459
      %p463 = pneg %p457
      %p464 = scmp.eq.s32.totalorder %s33, 3
      %p465 = por %p463, %p464
      %p466 = scmp.ne.s32.totalorder %s458, %s461
      %p467 = scmp.eq.s32.totalorder %s33, 0
      %p468 = por %p466, %p467
      %p469 = scmp.ne.s32.totalorder %s458, %s461
      %p470 = scmp.eq.s32.totalorder %s38, 3
      %p471 = por %p469, %p470
      %p472 = scmp.ne.s32.totalorder %s461, %s462
      %p473 = scmp.eq.s32.totalorder %s38, 0
      %p474 = por %p472, %p473
      %p475 = scmp.ne.s32.totalorder %s461, %s462
      %p476 = scmp.eq.s32.totalorder %s39, 3
      %p477 = por %p475, %p476
      %p479 = scmp.ne.s32.totalorder %s462, %s478
      %p480 = scmp.eq.s32.totalorder %s39, 0
      %p481 = por %p479, %p480
      %s482 = ssub.s32 %s40, %s52
      %p483 = scmp.eq.s32.totalorder %s482, 0
      %s485 = sadd.s32 %s484, 1
      %s486 = scalar_select %p483, %s484, %s485
      %p489 = pneg %p483
      %p490 = scmp.eq.s32.totalorder %s33, 3
      %p491 = por %p489, %p490
      %p492 = scmp.ne.s32.totalorder %s484, %s487
      %p493 = scmp.eq.s32.totalorder %s33, 0
      %p494 = por %p492, %p493
      %p495 = scmp.ne.s32.totalorder %s484, %s487
      %p496 = scmp.eq.s32.totalorder %s38, 3
      %p497 = por %p495, %p496
      %p498 = scmp.ne.s32.totalorder %s487, %s488
      %p499 = scmp.eq.s32.totalorder %s38, 0
      %p500 = por %p498, %p499
      %p501 = scmp.ne.s32.totalorder %s487, %s488
      %p502 = scmp.eq.s32.totalorder %s39, 3
      %p503 = por %p501, %p502
      %p505 = scmp.ne.s32.totalorder %s488, %s504
      %p506 = scmp.eq.s32.totalorder %s39, 0
      %p507 = por %p505, %p506
      %p508 = scmp.le.s32.totalorder 1, %s33
      %p509 = scmp.lt.s32.totalorder %s33, 5
      %p510 = pnand %p508, %p509
      %p511 = pneg %p510
      // Predicated region
      $region9: #{tpu_custom_call.1} parent=5 // pred_check
        _
      $region10: #{tpu_custom_call.1} parent=5 // pred_check_branch
        %513 = sbr.rel (%p510) target = $region12
      $region11: #{tpu_custom_call.1} parent=5 // pred_region
        %s514 = ssub.s32 %s33, 1
        // Predicated region
        $region13: #{tpu_custom_call.1} parent=11 // pred_check
          %p515 = pneg %p196
        $region14: #{tpu_custom_call.1} parent=11 // pred_check_branch
          %517 = sbr.rel (%p515) target = $region16
        $region15: #{tpu_custom_call.1} parent=11 // pred_region
          %519 = vsyncadd [#allocation13], 0
          %s520 = sshll.u32 %s5, 4
          %s521 = int_to_ptr.hbm [resolvable:$true] %s520
          %s522 = sshll.u32 [#allocation12], 4
          %s523 = int_to_ptr.vmem [resolvable:$true] %s522
          %528 = dma.hbm_to_vmem [thread:$0]  %s521, 512, %s523, [#allocation13], 128, 128, 8
        $region16: #{tpu_custom_call.1} parent=11 // pred_fallthru
          _
        // Predicated region
        $region17: #{tpu_custom_call.1} parent=11 // pred_check
          %p529 = pneg %p217
        $region18: #{tpu_custom_call.1} parent=11 // pred_check_branch
          %531 = sbr.rel (%p529) target = $region20
        $region19: #{tpu_custom_call.1} parent=11 // pred_region
          %533 = vsyncadd [#allocation13], 0
          %s534 = sshll.u32 %s6, 4
          %s535 = int_to_ptr.hbm [resolvable:$true] %s534
          %s536 = sshll.u32 [#allocation14], 4
          %s537 = int_to_ptr.vmem [resolvable:$true] %s536
          %542 = dma.hbm_to_vmem [thread:$0]  %s535, 512, %s537, [#allocation13], 128, 128, 8
        $region20: #{tpu_custom_call.1} parent=11 // pred_fallthru
          _
        // Predicated region
        $region21: #{tpu_custom_call.1} parent=11 // pred_check
          %p543 = pneg %p238
        $region22: #{tpu_custom_call.1} parent=11 // pred_check_branch
          %545 = sbr.rel (%p543) target = $region24
        $region23: #{tpu_custom_call.1} parent=11 // pred_region
          _
        $region24: #{tpu_custom_call.1} parent=11 // pred_fallthru
          _
        // Predicated region
        $region25: #{tpu_custom_call.1} parent=11 // pred_check
          %p546 = pneg %p259
        $region26: #{tpu_custom_call.1} parent=11 // pred_check_branch
          %548 = sbr.rel (%p546) target = $region28
        $region27: #{tpu_custom_call.1} parent=11 // pred_region
          _
        $region28: #{tpu_custom_call.1} parent=11 // pred_fallthru
          _
        // Predicated region
        $region29: #{tpu_custom_call.1} parent=11 // pred_check
          %p549 = pneg %p280
        $region30: #{tpu_custom_call.1} parent=11 // pred_check_branch
          %551 = sbr.rel (%p549) target = $region32
        $region31: #{tpu_custom_call.1} parent=11 // pred_region
          %553 = vsyncadd [#allocation16], 0
          %s555 = sshll.u32 %s9, 4
          %s556 = int_to_ptr.hbm [resolvable:$true] %s555
          %s557 = sshll.u32 [#allocation15], 4
          %s558 = int_to_ptr.vmem [resolvable:$true] %s557
          %560 = dma.hbm_to_vmem [thread:$0]  %s556, 256, %s558, [#allocation16]
        $region32: #{tpu_custom_call.1} parent=11 // pred_fallthru
          _
        // Predicated region
        $region33: #{tpu_custom_call.1} parent=11 // pred_check
          %p561 = pneg %p301
        $region34: #{tpu_custom_call.1} parent=11 // pred_check_branch
          %563 = sbr.rel (%p561) target = $region36
        $region35: #{tpu_custom_call.1} parent=11 // pred_region
          %565 = vsyncadd [#allocation16], 0
          %s567 = sshll.u32 %s10, 4
          %s568 = int_to_ptr.hbm [resolvable:$true] %s567
          %s569 = sshll.u32 [#allocation17], 4
          %s570 = int_to_ptr.vmem [resolvable:$true] %s569
          %572 = dma.hbm_to_vmem [thread:$0]  %s568, 128, %s570, [#allocation16]
        $region36: #{tpu_custom_call.1} parent=11 // pred_fallthru
          _
        // Predicated region
        $region37: #{tpu_custom_call.1} parent=11 // pred_check
          %p573 = pneg %p322
        $region38: #{tpu_custom_call.1} parent=11 // pred_check_branch
          %575 = sbr.rel (%p573) target = $region40
        $region39: #{tpu_custom_call.1} parent=11 // pred_region
          _
        $region40: #{tpu_custom_call.1} parent=11 // pred_fallthru
          _
        // Predicated region
        $region41: #{tpu_custom_call.1} parent=11 // pred_check
          %p576 = pneg %p343
        $region42: #{tpu_custom_call.1} parent=11 // pred_check_branch
          %578 = sbr.rel (%p576) target = $region44
        $region43: #{tpu_custom_call.1} parent=11 // pred_region
          _
        $region44: #{tpu_custom_call.1} parent=11 // pred_fallthru
          _
        // Predicated region
        $region45: #{tpu_custom_call.1} parent=11 // pred_check
          %p579 = pneg %p364
        $region46: #{tpu_custom_call.1} parent=11 // pred_check_branch
          %581 = sbr.rel (%p579) target = $region48
        $region47: #{tpu_custom_call.1} parent=11 // pred_region
          _
        $region48: #{tpu_custom_call.1} parent=11 // pred_fallthru
          _
        // Predicated region
        $region49: #{tpu_custom_call.1} parent=11 // pred_check
          %p582 = pneg %p385
        $region50: #{tpu_custom_call.1} parent=11 // pred_check_branch
          %584 = sbr.rel (%p582) target = $region52
        $region51: #{tpu_custom_call.1} parent=11 // pred_region
          _
        $region52: #{tpu_custom_call.1} parent=11 // pred_fallthru
          _
        // Predicated region
        $region53: #{tpu_custom_call.1} parent=11 // pred_check
          %p585 = pneg %p406
        $region54: #{tpu_custom_call.1} parent=11 // pred_check_branch
          %587 = sbr.rel (%p585) target = $region56
        $region55: #{tpu_custom_call.1} parent=11 // pred_region
          _
        $region56: #{tpu_custom_call.1} parent=11 // pred_fallthru
          _
        // Predicated region
        $region57: #{tpu_custom_call.1} parent=11 // pred_check
          %p588 = pneg %p427
        $region58: #{tpu_custom_call.1} parent=11 // pred_check_branch
          %590 = sbr.rel (%p588) target = $region60
        $region59: #{tpu_custom_call.1} parent=11 // pred_region
          _
        $region60: #{tpu_custom_call.1} parent=11 // pred_fallthru
          _
        // Predicated region
        $region61: #{tpu_custom_call.1} parent=11 // pred_check
          %p591 = pneg %p448
        $region62: #{tpu_custom_call.1} parent=11 // pred_check_branch
          %593 = sbr.rel (%p591) target = $region64
        $region63: #{tpu_custom_call.1} parent=11 // pred_region
          _
        $region64: #{tpu_custom_call.1} parent=11 // pred_fallthru
          _
      $region12: #{tpu_custom_call.1} parent=5 // pred_fallthru
        _
      %p594 = scmp.lt.s32.totalorder %s33, 4
      // Predicated region
      $region65: #{tpu_custom_call.1} parent=5 // pred_check
        %p595 = pneg %p594
      $region66: #{tpu_custom_call.1} parent=5 // pred_check_branch
        %597 = sbr.rel (%p595) target = $region68
      $region67: #{tpu_custom_call.1} parent=5 // pred_region
        // Predicated region
        $region69: #{tpu_custom_call.1} parent=67 // pred_check
          %p598 = pneg %p65
        $region70: #{tpu_custom_call.1} parent=67 // pred_check_branch
          %600 = sbr.rel (%p598) target = $region72
        $region71: #{tpu_custom_call.1} parent=67 // pred_region
          %p601 = scmp.lt.s32.totalorder %s40, 1
          %s602 = scalar_select %p601, %s40, 1
          %s603 = smul.addr %s602, 2
          %s604 = smul.addr %s603, 4
          %s605 = scalar_lea.vmem %s0, %s604
        $region72: #{tpu_custom_call.1} parent=67 // pred_fallthru
          _
        // Predicated region
        $region73: #{tpu_custom_call.1} parent=67 // pred_check
          %p606 = pneg %p91
        $region74: #{tpu_custom_call.1} parent=67 // pred_check_branch
          %608 = sbr.rel (%p606) target = $region76
        $region75: #{tpu_custom_call.1} parent=67 // pred_region
          %p609 = scmp.lt.s32.totalorder %s40, 1
          %s610 = scalar_select %p609, %s40, 1
          %s611 = smul.addr %s610, 4
          %s612 = smul.addr %s611, 4
          %s613 = scalar_lea.vmem %s1, %s612
        $region76: #{tpu_custom_call.1} parent=67 // pred_fallthru
          _
        // Predicated region
        $region77: #{tpu_custom_call.1} parent=67 // pred_check
          %p614 = pneg %p117
        $region78: #{tpu_custom_call.1} parent=67 // pred_check_branch
          %616 = sbr.rel (%p614) target = $region80
        $region79: #{tpu_custom_call.1} parent=67 // pred_region
          %p617 = scmp.lt.s32.totalorder %s40, 1
          %s618 = scalar_select %p617, %s40, 1
          %s619 = smul.addr %s618, 2
          %s620 = smul.addr %s619, 8
          %s621 = scalar_lea.vmem %s2, %s620
        $region80: #{tpu_custom_call.1} parent=67 // pred_fallthru
          _
        // Predicated region
        $region81: #{tpu_custom_call.1} parent=67 // pred_check
          %p622 = pneg %p143
        $region82: #{tpu_custom_call.1} parent=67 // pred_check_branch
          %624 = sbr.rel (%p622) target = $region84
        $region83: #{tpu_custom_call.1} parent=67 // pred_region
          %p625 = scmp.lt.s32.totalorder %s40, 1
          %s626 = scalar_select %p625, %s40, 1
          %s627 = smul.addr %s626, 8
          %s628 = scalar_lea.vmem %s3, %s627
        $region84: #{tpu_custom_call.1} parent=67 // pred_fallthru
          _
        // Predicated region
        $region85: #{tpu_custom_call.1} parent=67 // pred_check
          %p629 = pneg %p169
        $region86: #{tpu_custom_call.1} parent=67 // pred_check_branch
          %631 = sbr.rel (%p629) target = $region88
        $region87: #{tpu_custom_call.1} parent=67 // pred_region
          %s632 = sand.u32 %s159, 1
          %s633 = scalar_lea.sflag [#allocation11], %s632
          %s634 = sand.u32 %s159, 1
          %s635 = scalar_lea.vmem [#allocation10], %s634
          %637 = vsyncadd %s633, 0
          %s638 = scalar_lea.hbm %s4, %s40
          %s640 = sshll.u32 %s638, 4
          %s641 = int_to_ptr.hbm [resolvable:$true] %s640
          %s642 = sshll.u32 %s635, 4
          %s643 = int_to_ptr.vmem [resolvable:$true] %s642
          %645 = dma.hbm_to_vmem [thread:$0]  %s641, 16, %s643, %s633
        $region88: #{tpu_custom_call.1} parent=67 // pred_fallthru
          _
      $region68: #{tpu_custom_call.1} parent=5 // pred_fallthru
        _
      %p646 = scmp.le.s32.totalorder 1, %s33
      %p647 = scmp.lt.s32.totalorder %s33, 5
      %p648 = pnand %p646, %p647
      %p649 = pneg %p648
      // Predicated region
      $region89: #{tpu_custom_call.1} parent=5 // pred_check
        _
      $region90: #{tpu_custom_call.1} parent=5 // pred_check_branch
        %651 = sbr.rel (%p648) target = $region92
      $region91: #{tpu_custom_call.1} parent=5 // pred_region
        %s652 = ssub.s32 %s33, 1
        %s653 = sand.u32 %s162, 1
        %s654 = scalar_lea.sflag [#allocation11], %s653
        %s655 = sand.u32 %s162, 1
        %s656 = scalar_lea.vmem [#allocation10], %s655
        // Predicated region
        $region93: #{tpu_custom_call.1} parent=91 // pred_check
          %p657 = pneg %p175
        $region94: #{tpu_custom_call.1} parent=91 // pred_check_branch
          %659 = sbr.rel (%p657) target = $region96
        $region95: #{tpu_custom_call.1} parent=91 // pred_region
          %661 = dma.done %s654, 16
        $region96: #{tpu_custom_call.1} parent=91 // pred_fallthru
          _
        // Predicated region
        $region97: #{tpu_custom_call.1} parent=91 // pred_check
          %p662 = pneg %p196
        $region98: #{tpu_custom_call.1} parent=91 // pred_check_branch
          %664 = sbr.rel (%p662) target = $region100
        $region99: #{tpu_custom_call.1} parent=91 // pred_region
          %666 = dma.done [#allocation13], 512
        $region100: #{tpu_custom_call.1} parent=91 // pred_fallthru
          _
        // Predicated region
        $region101: #{tpu_custom_call.1} parent=91 // pred_check
          %p667 = pneg %p217
        $region102: #{tpu_custom_call.1} parent=91 // pred_check_branch
          %669 = sbr.rel (%p667) target = $region104
        $region103: #{tpu_custom_call.1} parent=91 // pred_region
          %671 = dma.done [#allocation13], 512
        $region104: #{tpu_custom_call.1} parent=91 // pred_fallthru
          _
        // Predicated region
        $region105: #{tpu_custom_call.1} parent=91 // pred_check
          %p672 = pneg %p280
        $region106: #{tpu_custom_call.1} parent=91 // pred_check_branch
          %674 = sbr.rel (%p672) target = $region108
        $region107: #{tpu_custom_call.1} parent=91 // pred_region
          %676 = dma.done [#allocation16], 256
        $region108: #{tpu_custom_call.1} parent=91 // pred_fallthru
          _
        // Predicated region
        $region109: #{tpu_custom_call.1} parent=91 // pred_check
          %p677 = pneg %p301
        $region110: #{tpu_custom_call.1} parent=91 // pred_check_branch
          %679 = sbr.rel (%p677) target = $region112
        $region111: #{tpu_custom_call.1} parent=91 // pred_region
          %681 = dma.done [#allocation16], 128
        $region112: #{tpu_custom_call.1} parent=91 // pred_fallthru
          _
        %p682 = scmp.lt.s32.totalorder %s42, 1
        %s683 = scalar_select %p682, %s42, 1
        %s684 = smul.addr %s683, 2
        %s685 = smul.addr %s684, 4
        %s686 = scalar_lea.vmem %s0, %s685
        %p687 = pneg %p71
        %p688 = pneg %p68
        %p689 = scmp.lt.s32.totalorder %s42, 1
        %s690 = scalar_select %p689, %s42, 1
        %s691 = smul.addr %s690, 4
        %s692 = smul.addr %s691, 4
        %s693 = scalar_lea.vmem %s1, %s692
        %p694 = pneg %p97
        %p695 = pneg %p94
        %p696 = scmp.lt.s32.totalorder %s42, 1
        %s697 = scalar_select %p696, %s42, 1
        %s698 = smul.addr %s697, 2
        %s699 = smul.addr %s698, 8
        %s700 = scalar_lea.vmem %s2, %s699
        %p701 = pneg %p123
        %p702 = pneg %p120
        %p703 = scmp.lt.s32.totalorder %s42, 1
        %s704 = scalar_select %p703, %s42, 1
        %s705 = smul.addr %s704, 8
        %s706 = scalar_lea.vmem %s3, %s705
        %p707 = pneg %p149
        %p708 = pneg %p146
        %s709 = sand.u32 %s162, 1
        %s710 = scalar_lea.sflag [#allocation11], %s709
        %s711 = sand.u32 %s162, 1
        %s712 = scalar_lea.vmem [#allocation10], %s711
        %p713 = pneg %p175
        %p714 = pneg %p172
        %p715 = pneg %p196
        %p716 = pneg %p193
        %p717 = pneg %p217
        %p718 = pneg %p214
        %p719 = pneg %p238
        %p720 = pneg %p235
        %p721 = pneg %p259
        %p722 = pneg %p256
        %p723 = pneg %p280
        %p724 = pneg %p277
        %p725 = pneg %p301
        %p726 = pneg %p298
        %p727 = pneg %p322
        %p728 = pneg %p319
        %p729 = pneg %p343
        %p730 = pneg %p340
        %p731 = pneg %p364
        %p732 = pneg %p361
        %p733 = pneg %p385
        %p734 = pneg %p382
        %p735 = pneg %p406
        %p736 = pneg %p403
        %p737 = pneg %p427
        %p738 = pneg %p424
        %p739 = pneg %p448
        %p740 = pneg %p445
        %p741 = pneg %p474
        %p742 = pneg %p471
        %p743 = scmp.lt.s32.totalorder %s42, 1
        %s744 = scalar_select %p743, %s42, 1
        %s745 = smul.addr %s744, 2
        %s746 = smul.addr %s745, 8
        %s747 = scalar_lea.vmem %s18, %s746
        %p748 = pneg %p500
        %p749 = pneg %p497
        %p750 = scmp.lt.s32.totalorder %s42, 1
        %s751 = scalar_select %p750, %s42, 1
        %s752 = smul.addr %s751, 2
        %s753 = smul.addr %s752, 8
        %s754 = scalar_lea.vmem %s19, %s753
        %p755 = scmp.lt.s32.totalorder %s42, 1
        %s756 = scalar_select %p755, %s42, 1
        %s757 = smul.addr %s756, 2
        %s758 = smul.addr %s757, 4
        %s759 = scalar_lea.vmem %s0, %s758
        %p760 = scmp.lt.s32.totalorder %s42, 1
        %s761 = scalar_select %p760, %s42, 1
        %s762 = smul.addr %s761, 4
        %s763 = smul.addr %s762, 4
        %s764 = scalar_lea.vmem %s1, %s763
        %p765 = scmp.lt.s32.totalorder %s42, 1
        %s766 = scalar_select %p765, %s42, 1
        %s767 = smul.addr %s766, 2
        %s768 = smul.addr %s767, 8
        %s769 = scalar_lea.vmem %s2, %s768
        %p770 = scmp.lt.s32.totalorder %s42, 1
        %s771 = scalar_select %p770, %s42, 1
        %s772 = smul.addr %s771, 8
        %s773 = scalar_lea.vmem %s3, %s772
        %p774 = scmp.lt.s32.totalorder %s42, 1
        %s775 = scalar_select %p774, %s42, 1
        %s776 = smul.addr %s775, 2
        %s777 = smul.addr %s776, 8
        %s778 = scalar_lea.vmem %s18, %s777
        %p779 = scmp.lt.s32.totalorder %s42, 1
        %s780 = scalar_select %p779, %s42, 1
        %s781 = smul.addr %s780, 2
        %s782 = smul.addr %s781, 8
        %s783 = scalar_lea.vmem %s19, %s782
        %s785 = smul.u32 %s43, 8
        %p786 = scmp.eq.s32.totalorder %s43, 0
        // Predicated region
        $region113: #{tpu_custom_call.1} parent=91 // pred_check
          %p787 = pneg %p786
        $region114: #{tpu_custom_call.1} parent=91 // pred_check_branch
          %789 = sbr.rel (%p787) target = $region116
        $region115: #{tpu_custom_call.1} parent=91 // pred_region
          %v790 = vld [vmem:[%s759] sm:$0xf]
          %v791 = vld [vmem:[%s759 + $0x4] sm:$0xf]
          %v792 = vld [vmem:[%s769] sm:$0xff]
          %v793 = vld [vmem:[%s769 + $0x8] sm:$0xff]
          %v794 = vld [vmem:[%s656] sm:$0x1]
          %v795 = vld [vmem:[%s7] sm:$0xff]
          %v796 = vld [vmem:[%s7 + $0x8] sm:$0xff]
          %v797 = vld [vmem:[%s7 + $0x10] sm:$0xff]
          %v798 = vld [vmem:[%s7 + $0x18] sm:$0xff]
          %v799 = vld [vmem:[%s7 + $0x20] sm:$0xff]
          %v800 = vld [vmem:[%s7 + $0x28] sm:$0xff]
          %v801 = vld [vmem:[%s7 + $0x30] sm:$0xff]
          %v802 = vld [vmem:[%s7 + $0x38] sm:$0xff]
          %v803 = vld [vmem:[%s11] sm:$0x3]
          %v805 = vperm.slane %v803, 0
          %v806 = vperm.slane %v803, 1
          %vm809 = vcmask 261120
          %v811 = vsel %vm809, %v794, 0
          %813 = vmatpush.msra.mxu0 0.0
          %814 = vmatpush.msra.mxu0 0.0
          %815 = vmatpush.msra.mxu0 0.0
          %816 = vmatpush.msra.mxu0 0.0
          %817 = vmatpush.msra.mxu0 0.0
          %818 = vmatpush.msra.mxu0 0.0
          %819 = vmatpush.msra.mxu0 0.0
          %820 = vmatpush.msra.mxu0 0.0
          %821 = vmatpush.msra.mxu0 0.0
          %822 = vmatpush.msra.mxu0 0.0
          %823 = vmatpush.msra.mxu0 0.0
          %824 = vmatpush.msra.mxu0 0.0
          %825 = vmatpush.msra.mxu0 %v801
          %826 = vmatpush.msra.mxu0 %v799
          %827 = vmatpush.msra.mxu0 %v797
          %828 = vmatpush.msra.mxu0 %v795
          %829 = vmatmul.f32.gmra.mxu0 %v811
          %v830 = vpop.f32.mrf.mxu0
          %v831 = vadd.f32 %v805, %v830
          %832 = vdwg.mxu0
          %833 = vmatpush.msra.mxu0 0.0
          %834 = vmatpush.msra.mxu0 0.0
          %835 = vmatpush.msra.mxu0 0.0
          %836 = vmatpush.msra.mxu0 0.0
          %837 = vmatpush.msra.mxu0 0.0
          %838 = vmatpush.msra.mxu0 0.0
          %839 = vmatpush.msra.mxu0 0.0
          %840 = vmatpush.msra.mxu0 0.0
          %841 = vmatpush.msra.mxu0 0.0
          %842 = vmatpush.msra.mxu0 0.0
          %843 = vmatpush.msra.mxu0 0.0
          %844 = vmatpush.msra.mxu0 0.0
          %845 = vmatpush.msra.mxu0 %v802
          %846 = vmatpush.msra.mxu0 %v800
          %847 = vmatpush.msra.mxu0 %v798
          %848 = vmatpush.msra.mxu0 %v796
          %849 = vmatmul.f32.gmra.mxu0 %v811
          %v850 = vpop.f32.mrf.mxu0
          %v851 = vadd.f32 %v806, %v850
          %852 = vdwg.mxu0
          %v853 = vld [vmem:[#allocation12] sm:$0xff]
          %v854 = vld [vmem:[#allocation12 + $0x8] sm:$0xff]
          %v855 = vld [vmem:[#allocation12 + $0x10] sm:$0xff]
          %v856 = vld [vmem:[#allocation12 + $0x18] sm:$0xff]
          %v857 = vld [vmem:[%s8] sm:$0x3f]
          %v858 = vld [vmem:[%s8 + $0x8] sm:$0x3f]
          %vm859 = vcmask 48128
          %v861 = vsel %vm859, %v792, 0
          %v864 = vsel %vm859, %v793, 0
          %vm866 = vcmask 1045504
          %v868 = vsel %vm866, %v857, 0
          %v871 = vsel %vm866, %v858, 0
          %873 = vmatpush.msra.mxu0 0.0
          %874 = vmatpush.msra.mxu0 0.0
          %875 = vmatpush.msra.mxu0 0.0
          %876 = vmatpush.msra.mxu0 0.0
          %877 = vmatpush.msra.mxu0 0.0
          %878 = vmatpush.msra.mxu0 0.0
          %879 = vmatpush.msra.mxu0 0.0
          %880 = vmatpush.msra.mxu0 0.0
          %881 = vmatpush.msra.mxu0 0.0
          %882 = vmatpush.msra.mxu0 0.0
          %883 = vmatpush.msra.mxu0 0.0
          %884 = vmatpush.msra.mxu0 0.0
          %885 = vmatpush.msra.mxu0 0.0
          %886 = vmatpush.msra.mxu0 0.0
          %887 = vmatpush.msra.mxu0 0.0
          %888 = vmatpush.msra.mxu0 %v868
          %889 = vmatmul.f32.gmra.mxu0 %v861
          %v890 = vpop.f32.mrf.mxu0
          %v891 = vadd.f32 0.0, %v890
          %892 = vmatmul.f32.gmra.mxu0 %v864
          %v893 = vpop.f32.mrf.mxu0
          %v894 = vadd.f32 0.0, %v893
          %895 = vdwg.mxu0
          %896 = vmatpush.msra.mxu0 0.0
          %897 = vmatpush.msra.mxu0 0.0
          %898 = vmatpush.msra.mxu0 0.0
          %899 = vmatpush.msra.mxu0 0.0
          %900 = vmatpush.msra.mxu0 0.0
          %901 = vmatpush.msra.mxu0 0.0
          %902 = vmatpush.msra.mxu0 0.0
          %903 = vmatpush.msra.mxu0 0.0
          %904 = vmatpush.msra.mxu0 0.0
          %905 = vmatpush.msra.mxu0 0.0
          %906 = vmatpush.msra.mxu0 0.0
          %907 = vmatpush.msra.mxu0 0.0
          %908 = vmatpush.msra.mxu0 0.0
          %909 = vmatpush.msra.mxu0 0.0
          %910 = vmatpush.msra.mxu0 0.0
          %911 = vmatpush.msra.mxu0 %v871
          %912 = vmatmul.f32.gmra.mxu0 %v861
          %v913 = vpop.f32.mrf.mxu0
          %v914 = vadd.f32 0.0, %v913
          %915 = vmatmul.f32.gmra.mxu0 %v864
          %v916 = vpop.f32.mrf.mxu0
          %v917 = vadd.f32 0.0, %v916
          %918 = vdwg.mxu0
          %v921 = vunpack.c.l.b16 %v790
          %v922 = vunpack.c.l.b16 %v791
          %v923 = vpack.c.b16 %v922, %v921
          %v928 = vunpack.c.l.b16 %v853
          %v929 = vunpack.c.h.b16 %v853
          %v930 = vunpack.c.l.b16 %v854
          %v931 = vunpack.c.h.b16 %v854
          %v932 = vunpack.c.l.b16 %v855
          %v933 = vunpack.c.h.b16 %v855
          %v934 = vunpack.c.l.b16 %v856
          %v935 = vunpack.c.h.b16 %v856
          %v936 = vpack.c.b16 %v930, %v928
          %v937 = vpack.c.b16 %v931, %v929
          %v938 = vpack.c.b16 %v934, %v932
          %v939 = vpack.c.b16 %v935, %v933
          %v945 = vsel %vm809, %v923, 0
          %947 = vmatpush.bf16.msra.mxu0 0
          %948 = vmatpush.bf16.msra.mxu0 0
          %949 = vmatpush.bf16.msra.mxu0 0
          %950 = vmatpush.bf16.msra.mxu0 0
          %951 = vmatpush.bf16.msra.mxu0 0
          %952 = vmatpush.bf16.msra.mxu0 0
          %953 = vmatpush.bf16.msra.mxu0 %v938
          %954 = vmatpush.bf16.msra.mxu0 %v936
          %955 = vmatmul.bf16.gmra.mxu0 %v945
          %v956 = vpop.f32.mrf.mxu0
          %v957 = vadd.f32 %v891, %v956
          %v958 = vpop.f32.mrf.mxu0
          %v959 = vadd.f32 %v894, %v958
          %960 = vdwg.mxu0
          %961 = vmatpush.bf16.msra.mxu0 0
          %962 = vmatpush.bf16.msra.mxu0 0
          %963 = vmatpush.bf16.msra.mxu0 0
          %964 = vmatpush.bf16.msra.mxu0 0
          %965 = vmatpush.bf16.msra.mxu0 0
          %966 = vmatpush.bf16.msra.mxu0 0
          %967 = vmatpush.bf16.msra.mxu0 %v939
          %968 = vmatpush.bf16.msra.mxu0 %v937
          %969 = vmatmul.bf16.gmra.mxu0 %v945
          %v970 = vpop.f32.mrf.mxu0
          %v971 = vadd.f32 %v914, %v970
          %v972 = vpop.f32.mrf.mxu0
          %v973 = vadd.f32 %v917, %v972
          %974 = vdwg.mxu0
          %v975 = vperm.slane %v831, 0
          %v976 = vperm.slane %v851, 0
          %v977 = vadd.f32 %v957, %v975
          %v978 = vadd.f32 %v971, %v976
          %v979 = vadd.f32 %v959, %v975
          %v980 = vadd.f32 %v973, %v976
          %981 = vst [vmem:[#allocation2] sm:$0xff] %v977
          %982 = vst [vmem:[#allocation2 + $0x8] sm:$0xff] %v978
          %983 = vst [vmem:[#allocation2 + $0x10] sm:$0xff] %v979
          %984 = vst [vmem:[#allocation2 + $0x18] sm:$0xff] %v980
          %v985 = vld [vmem:[#allocation14] sm:$0xff]
          %v986 = vld [vmem:[#allocation14 + $0x8] sm:$0xff]
          %v987 = vld [vmem:[#allocation14 + $0x10] sm:$0xff]
          %v988 = vld [vmem:[#allocation14 + $0x18] sm:$0xff]
          %v989 = vld [vmem:[#allocation15] sm:$0x3f]
          %v990 = vld [vmem:[#allocation15 + $0x8] sm:$0x3f]
          %v992 = vsel %vm866, %v989, 0
          %v995 = vsel %vm866, %v990, 0
          %997 = vmatpush.msra.mxu0 0.0
          %998 = vmatpush.msra.mxu0 0.0
          %999 = vmatpush.msra.mxu0 0.0
          %1000 = vmatpush.msra.mxu0 0.0
          %1001 = vmatpush.msra.mxu0 0.0
          %1002 = vmatpush.msra.mxu0 0.0
          %1003 = vmatpush.msra.mxu0 0.0
          %1004 = vmatpush.msra.mxu0 0.0
          %1005 = vmatpush.msra.mxu0 0.0
          %1006 = vmatpush.msra.mxu0 0.0
          %1007 = vmatpush.msra.mxu0 0.0
          %1008 = vmatpush.msra.mxu0 0.0
          %1009 = vmatpush.msra.mxu0 0.0
          %1010 = vmatpush.msra.mxu0 0.0
          %1011 = vmatpush.msra.mxu0 0.0
          %1012 = vmatpush.msra.mxu0 %v992
          %1013 = vmatmul.f32.gmra.mxu0 %v861
          %v1014 = vpop.f32.mrf.mxu0
          %v1015 = vadd.f32 0.0, %v1014
          %1016 = vmatmul.f32.gmra.mxu0 %v864
          %v1017 = vpop.f32.mrf.mxu0
          %v1018 = vadd.f32 0.0, %v1017
          %1019 = vdwg.mxu0
          %1020 = vmatpush.msra.mxu0 0.0
          %1021 = vmatpush.msra.mxu0 0.0
          %1022 = vmatpush.msra.mxu0 0.0
          %1023 = vmatpush.msra.mxu0 0.0
          %1024 = vmatpush.msra.mxu0 0.0
          %1025 = vmatpush.msra.mxu0 0.0
          %1026 = vmatpush.msra.mxu0 0.0
          %1027 = vmatpush.msra.mxu0 0.0
          %1028 = vmatpush.msra.mxu0 0.0
          %1029 = vmatpush.msra.mxu0 0.0
          %1030 = vmatpush.msra.mxu0 0.0
          %1031 = vmatpush.msra.mxu0 0.0
          %1032 = vmatpush.msra.mxu0 0.0
          %1033 = vmatpush.msra.mxu0 0.0
          %1034 = vmatpush.msra.mxu0 0.0
          %1035 = vmatpush.msra.mxu0 %v995
          %1036 = vmatmul.f32.gmra.mxu0 %v861
          %v1037 = vpop.f32.mrf.mxu0
          %v1038 = vadd.f32 0.0, %v1037
          %1039 = vmatmul.f32.gmra.mxu0 %v864
          %v1040 = vpop.f32.mrf.mxu0
          %v1041 = vadd.f32 0.0, %v1040
          %1042 = vdwg.mxu0
          %v1047 = vunpack.c.l.b16 %v985
          %v1048 = vunpack.c.h.b16 %v985
          %v1049 = vunpack.c.l.b16 %v986
          %v1050 = vunpack.c.h.b16 %v986
          %v1051 = vunpack.c.l.b16 %v987
          %v1052 = vunpack.c.h.b16 %v987
          %v1053 = vunpack.c.l.b16 %v988
          %v1054 = vunpack.c.h.b16 %v988
          %v1055 = vpack.c.b16 %v1049, %v1047
          %v1056 = vpack.c.b16 %v1050, %v1048
          %v1057 = vpack.c.b16 %v1053, %v1051
          %v1058 = vpack.c.b16 %v1054, %v1052
          %1063 = vmatpush.bf16.msra.mxu0 0
          %1064 = vmatpush.bf16.msra.mxu0 0
          %1065 = vmatpush.bf16.msra.mxu0 0
          %1066 = vmatpush.bf16.msra.mxu0 0
          %1067 = vmatpush.bf16.msra.mxu0 0
          %1068 = vmatpush.bf16.msra.mxu0 0
          %1069 = vmatpush.bf16.msra.mxu0 %v1057
          %1070 = vmatpush.bf16.msra.mxu0 %v1055
          %1071 = vmatmul.bf16.gmra.mxu0 %v945
          %v1072 = vpop.f32.mrf.mxu0
          %v1073 = vadd.f32 %v1015, %v1072
          %v1074 = vpop.f32.mrf.mxu0
          %v1075 = vadd.f32 %v1018, %v1074
          %1076 = vdwg.mxu0
          %1077 = vmatpush.bf16.msra.mxu0 0
          %1078 = vmatpush.bf16.msra.mxu0 0
          %1079 = vmatpush.bf16.msra.mxu0 0
          %1080 = vmatpush.bf16.msra.mxu0 0
          %1081 = vmatpush.bf16.msra.mxu0 0
          %1082 = vmatpush.bf16.msra.mxu0 0
          %1083 = vmatpush.bf16.msra.mxu0 %v1058
          %1084 = vmatpush.bf16.msra.mxu0 %v1056
          %1085 = vmatmul.bf16.gmra.mxu0 %v945
          %v1086 = vpop.f32.mrf.mxu0
          %v1087 = vadd.f32 %v1038, %v1086
          %v1088 = vpop.f32.mrf.mxu0
          %v1089 = vadd.f32 %v1041, %v1088
          %1090 = vdwg.mxu0
          %1091 = vst [vmem:[#allocation3] sm:$0xff] %v1073
          %1092 = vst [vmem:[#allocation3 + $0x8] sm:$0xff] %v1087
          %1093 = vst [vmem:[#allocation3 + $0x10] sm:$0xff] %v1075
          %1094 = vst [vmem:[#allocation3 + $0x18] sm:$0xff] %v1089
        $region116: #{tpu_custom_call.1} parent=91 // pred_fallthru
          _
        %s1095 = sshra.s32 %s785, 3
        %s1096 = sand.u32 %s785, 7
        %s1097 = smul.addr %s1095, 4
        %s1098 = scalar_lea.vmem %s759, %s1097
        %v1099 = vld [vmem:[%s1098] sm:$0xf]
        %v1100 = vld [vmem:[%s764] sm:$0xf]
        %v1101 = vld [vmem:[%s764 + $0x4] sm:$0xf]
        %v1102 = vld [vmem:[%s764 + $0x8] sm:$0xf]
        %v1103 = vld [vmem:[%s764 + $0xc] sm:$0xf]
        %v1108 = vunpack.c.l.b16 %v1100
        %v1109 = vunpack.c.l.b16 %v1101
        %v1110 = vunpack.c.l.b16 %v1102
        %v1111 = vunpack.c.l.b16 %v1103
        %v1112 = vpack.c.b16 %v1109, %v1108
        %v1113 = vpack.c.b16 %v1111, %v1110
        %vm1116 = vcmask 261120
        %v1118 = vsel %vm1116, %v1099, 0
        %1120 = vmatpush.bf16.msra.mxu0 0
        %1121 = vmatpush.bf16.msra.mxu0 0
        %1122 = vmatpush.bf16.msra.mxu0 0
        %1123 = vmatpush.bf16.msra.mxu0 0
        %1124 = vmatpush.bf16.msra.mxu0 0
        %1125 = vmatpush.bf16.msra.mxu0 0
        %1126 = vmatpush.bf16.msra.mxu0 %v1113
        %1127 = vmatpush.bf16.msra.mxu0 %v1112
        %1128 = vmatmul.bf16.gmra.mxu0 %v1118
        %v1129 = vpop.f32.mrf.mxu0
        %v1130 = vadd.f32 0.0, %v1129
        %v1131 = vpop.f32.mrf.mxu0
        %1132 = vdwg.mxu0
        %s1133 = scalar_lea.vmem %s769, %s785
        %v1134 = vld [vmem:[%s1133] sm:$0xff]
        %v1135 = vld [vmem:[%s773] sm:$0x3f]
        %1137 = vrot.lane.b32.xlu0 %v1134, 2
        %v1138 = vpop.permute.xlu0 %1137
        %v1140 = vsub.f32 %v1134, %v1138
        %1142 = vrot.lane.b32.xlu0 %v1140, 127
        %v1143 = vpop.permute.xlu0 %1142
        %v1145 = vmul.f32 %v1140, %v1143
        %v1147 = vrot.slane %v1135, 6
        %v1149 = vsub.f32 %v1135, %v1147
        %v1151 = vrot.slane %v1149, 1
        %v1153 = vmul.f32 %v1149, %v1151
        %1154 = vset.pattern.permute.xlu0 2
        %1155 = vperm.xlu0 %1154, %v1134
        %v1156 = vpop.permute.xlu0 %1155
        %v1158 = vperm.slane %v1135, 2
        %v1159 = vmin.f32 %v1156, %v1158
        %1160 = vset.pattern.permute.xlu0 0
        %1161 = vperm.xlu0 %1160, %v1134
        %v1162 = vpop.permute.xlu0 %1161
        %v1164 = vperm.slane %v1135, 0
        %v1165 = vmax.f32 %v1162, %v1164
        %v1166 = vsub.f32 %v1159, %v1165
        %v1167 = vmax.f32 %v1166, 0.0
        %1168 = vset.pattern.permute.xlu0 3
        %1169 = vperm.xlu0 %1168, %v1134
        %v1170 = vpop.permute.xlu0 %1169
        %v1172 = vperm.slane %v1135, 3
        %v1173 = vmin.f32 %v1170, %v1172
        %1174 = vset.pattern.permute.xlu0 1
        %1175 = vperm.xlu0 %1174, %v1134
        %v1176 = vpop.permute.xlu0 %1175
        %v1178 = vperm.slane %v1135, 1
        %v1179 = vmax.f32 %v1176, %v1178
        %v1180 = vsub.f32 %v1173, %v1179
        %v1181 = vmax.f32 %v1180, 0.0
        %v1182 = vmul.f32 %v1167, %v1181
        %v1183 = vadd.f32 %v1145, 1e-06
        %1185 = vset.pattern.permute.xlu0 2
        %1186 = vperm.xlu0 %1185, %v1183
        %v1187 = vpop.permute.xlu0 %1186
        %v1189 = vperm.slane %v1153, 2
        %v1190 = vadd.f32 %v1187, %v1189
        %v1191 = vsub.f32 %v1190, %v1182
        %v1192 = vrcp.pop %v1191
        %v1193 = vmul.f32 %v1182, %v1192
        %v1194 = vrcp.pop %v1183
        %1196 = vset.pattern.permute.xlu0 2
        %1197 = vperm.xlu0 %1196, %v1194
        %v1198 = vpop.permute.xlu0 %1197
        %v1200 = vmul.f32 %v1182, %v1198
        %v1201 = vadd.f32 %v1153, 1e-06
        %v1202 = vrcp.pop %v1201
        %v1203 = vperm.slane %v1202, 2
        %v1204 = vmul.f32 %v1182, %v1203
        %s1205 = scalar_lea.vmem [#allocation5], %s785
        %vm1206 = vcmask 130048
        %1207 = vst.msk [vmem:[%s1205] sm:$0xff] %vm1206, %v1130
        %s1208 = scalar_lea.vmem [#allocation6], %s785
        %1209 = vst.msk [vmem:[%s1208] sm:$0xff] %vm1206, %v1193
        %s1210 = scalar_lea.vmem [#allocation7], %s785
        %1211 = vst.msk [vmem:[%s1210] sm:$0xff] %vm1206, %v1200
        %s1212 = scalar_lea.vmem [#allocation8], %s785
        %1213 = vst.msk [vmem:[%s1212] sm:$0xff] %vm1206, %v1204
        %v1214 = vperm.slane %v1130, 0
        %v1215 = vlaneseq
        %v1216 = vshrl.u32 %v1215, 7
        %1218 = vset.pattern.permute.xlu0 %v1216
        %1219 = vperm.xlu0 %1218, %v1214
        %v1220 = vpop.permute.xlu0 %1219
        %v1221 = vlaneseq
        %v1222 = vshrl.u32 %v1221, 7
        %v1223 = vadd.s32 %v1222, 8
        %1224 = vset.pattern.permute.xlu0 %v1223
        %1225 = vperm.xlu0 %1224, %v1214
        %v1226 = vpop.permute.xlu0 %1225
        %v1227 = vperm.slane %v1130, 1
        %v1228 = vlaneseq
        %v1229 = vshrl.u32 %v1228, 7
        %1231 = vset.pattern.permute.xlu0 %v1229
        %1232 = vperm.xlu0 %1231, %v1227
        %v1233 = vpop.permute.xlu0 %1232
        %v1234 = vlaneseq
        %v1235 = vshrl.u32 %v1234, 7
        %v1236 = vadd.s32 %v1235, 8
        %1237 = vset.pattern.permute.xlu0 %v1236
        %1238 = vperm.xlu0 %1237, %v1227
        %v1239 = vpop.permute.xlu0 %1238
        %v1240 = vperm.slane %v1130, 2
        %v1241 = vlaneseq
        %v1242 = vshrl.u32 %v1241, 7
        %1244 = vset.pattern.permute.xlu0 %v1242
        %1245 = vperm.xlu0 %1244, %v1240
        %v1246 = vpop.permute.xlu0 %1245
        %v1247 = vlaneseq
        %v1248 = vshrl.u32 %v1247, 7
        %v1249 = vadd.s32 %v1248, 8
        %1250 = vset.pattern.permute.xlu0 %v1249
        %1251 = vperm.xlu0 %1250, %v1240
        %v1252 = vpop.permute.xlu0 %1251
        %v1253 = vperm.slane %v1130, 3
        %v1254 = vlaneseq
        %v1255 = vshrl.u32 %v1254, 7
        %1257 = vset.pattern.permute.xlu0 %v1255
        %1258 = vperm.xlu0 %1257, %v1253
        %v1259 = vpop.permute.xlu0 %1258
        %v1260 = vlaneseq
        %v1261 = vshrl.u32 %v1260, 7
        %v1262 = vadd.s32 %v1261, 8
        %1263 = vset.pattern.permute.xlu0 %v1262
        %1264 = vperm.xlu0 %1263, %v1253
        %v1265 = vpop.permute.xlu0 %1264
        %v1266 = vperm.slane %v1130, 4
        %v1267 = vlaneseq
        %v1268 = vshrl.u32 %v1267, 7
        %1270 = vset.pattern.permute.xlu0 %v1268
        %1271 = vperm.xlu0 %1270, %v1266
        %v1272 = vpop.permute.xlu0 %1271
        %v1273 = vlaneseq
        %v1274 = vshrl.u32 %v1273, 7
        %v1275 = vadd.s32 %v1274, 8
        %1276 = vset.pattern.permute.xlu0 %v1275
        %1277 = vperm.xlu0 %1276, %v1266
        %v1278 = vpop.permute.xlu0 %1277
        %v1279 = vperm.slane %v1130, 5
        %v1280 = vlaneseq
        %v1281 = vshrl.u32 %v1280, 7
        %1283 = vset.pattern.permute.xlu0 %v1281
        %1284 = vperm.xlu0 %1283, %v1279
        %v1285 = vpop.permute.xlu0 %1284
        %v1286 = vlaneseq
        %v1287 = vshrl.u32 %v1286, 7
        %v1288 = vadd.s32 %v1287, 8
        %1289 = vset.pattern.permute.xlu0 %v1288
        %1290 = vperm.xlu0 %1289, %v1279
        %v1291 = vpop.permute.xlu0 %1290
        %v1292 = vperm.slane %v1130, 6
        %v1293 = vlaneseq
        %v1294 = vshrl.u32 %v1293, 7
        %1296 = vset.pattern.permute.xlu0 %v1294
        %1297 = vperm.xlu0 %1296, %v1292
        %v1298 = vpop.permute.xlu0 %1297
        %v1299 = vlaneseq
        %v1300 = vshrl.u32 %v1299, 7
        %v1301 = vadd.s32 %v1300, 8
        %1302 = vset.pattern.permute.xlu0 %v1301
        %1303 = vperm.xlu0 %1302, %v1292
        %v1304 = vpop.permute.xlu0 %1303
        %v1305 = vperm.slane %v1130, 7
        %v1306 = vlaneseq
        %v1307 = vshrl.u32 %v1306, 7
        %1309 = vset.pattern.permute.xlu0 %v1307
        %1310 = vperm.xlu0 %1309, %v1305
        %v1311 = vpop.permute.xlu0 %1310
        %v1312 = vlaneseq
        %v1313 = vshrl.u32 %v1312, 7
        %v1314 = vadd.s32 %v1313, 8
        %1315 = vset.pattern.permute.xlu0 %v1314
        %1316 = vperm.xlu0 %1315, %v1305
        %v1317 = vpop.permute.xlu0 %1316
        %v1318 = vperm.slane %v1193, 0
        %v1319 = vlaneseq
        %v1320 = vshrl.u32 %v1319, 7
        %1322 = vset.pattern.permute.xlu0 %v1320
        %1323 = vperm.xlu0 %1322, %v1318
        %v1324 = vpop.permute.xlu0 %1323
        %v1325 = vlaneseq
        %v1326 = vshrl.u32 %v1325, 7
        %v1327 = vadd.s32 %v1326, 8
        %1328 = vset.pattern.permute.xlu0 %v1327
        %1329 = vperm.xlu0 %1328, %v1318
        %v1330 = vpop.permute.xlu0 %1329
        %v1331 = vperm.slane %v1193, 1
        %v1332 = vlaneseq
        %v1333 = vshrl.u32 %v1332, 7
        %1335 = vset.pattern.permute.xlu0 %v1333
        %1336 = vperm.xlu0 %1335, %v1331
        %v1337 = vpop.permute.xlu0 %1336
        %v1338 = vlaneseq
        %v1339 = vshrl.u32 %v1338, 7
        %v1340 = vadd.s32 %v1339, 8
        %1341 = vset.pattern.permute.xlu0 %v1340
        %1342 = vperm.xlu0 %1341, %v1331
        %v1343 = vpop.permute.xlu0 %1342
        %v1344 = vperm.slane %v1193, 2
        %v1345 = vlaneseq
        %v1346 = vshrl.u32 %v1345, 7
        %1348 = vset.pattern.permute.xlu0 %v1346
        %1349 = vperm.xlu0 %1348, %v1344
        %v1350 = vpop.permute.xlu0 %1349
        %v1351 = vlaneseq
        %v1352 = vshrl.u32 %v1351, 7
        %v1353 = vadd.s32 %v1352, 8
        %1354 = vset.pattern.permute.xlu0 %v1353
        %1355 = vperm.xlu0 %1354, %v1344
        %v1356 = vpop.permute.xlu0 %1355
        %v1357 = vperm.slane %v1193, 3
        %v1358 = vlaneseq
        %v1359 = vshrl.u32 %v1358, 7
        %1361 = vset.pattern.permute.xlu0 %v1359
        %1362 = vperm.xlu0 %1361, %v1357
        %v1363 = vpop.permute.xlu0 %1362
        %v1364 = vlaneseq
        %v1365 = vshrl.u32 %v1364, 7
        %v1366 = vadd.s32 %v1365, 8
        %1367 = vset.pattern.permute.xlu0 %v1366
        %1368 = vperm.xlu0 %1367, %v1357
        %v1369 = vpop.permute.xlu0 %1368
        %v1370 = vperm.slane %v1193, 4
        %v1371 = vlaneseq
        %v1372 = vshrl.u32 %v1371, 7
        %1374 = vset.pattern.permute.xlu0 %v1372
        %1375 = vperm.xlu0 %1374, %v1370
        %v1376 = vpop.permute.xlu0 %1375
        %v1377 = vlaneseq
        %v1378 = vshrl.u32 %v1377, 7
        %v1379 = vadd.s32 %v1378, 8
        %1380 = vset.pattern.permute.xlu0 %v1379
        %1381 = vperm.xlu0 %1380, %v1370
        %v1382 = vpop.permute.xlu0 %1381
        %v1383 = vperm.slane %v1193, 5
        %v1384 = vlaneseq
        %v1385 = vshrl.u32 %v1384, 7
        %1387 = vset.pattern.permute.xlu0 %v1385
        %1388 = vperm.xlu0 %1387, %v1383
        %v1389 = vpop.permute.xlu0 %1388
        %v1390 = vlaneseq
        %v1391 = vshrl.u32 %v1390, 7
        %v1392 = vadd.s32 %v1391, 8
        %1393 = vset.pattern.permute.xlu0 %v1392
        %1394 = vperm.xlu0 %1393, %v1383
        %v1395 = vpop.permute.xlu0 %1394
        %v1396 = vperm.slane %v1193, 6
        %v1397 = vlaneseq
        %v1398 = vshrl.u32 %v1397, 7
        %1400 = vset.pattern.permute.xlu0 %v1398
        %1401 = vperm.xlu0 %1400, %v1396
        %v1402 = vpop.permute.xlu0 %1401
        %v1403 = vlaneseq
        %v1404 = vshrl.u32 %v1403, 7
        %v1405 = vadd.s32 %v1404, 8
        %1406 = vset.pattern.permute.xlu0 %v1405
        %1407 = vperm.xlu0 %1406, %v1396
        %v1408 = vpop.permute.xlu0 %1407
        %v1409 = vperm.slane %v1193, 7
        %v1410 = vlaneseq
        %v1411 = vshrl.u32 %v1410, 7
        %1413 = vset.pattern.permute.xlu0 %v1411
        %1414 = vperm.xlu0 %1413, %v1409
        %v1415 = vpop.permute.xlu0 %1414
        %v1416 = vlaneseq
        %v1417 = vshrl.u32 %v1416, 7
        %v1418 = vadd.s32 %v1417, 8
        %1419 = vset.pattern.permute.xlu0 %v1418
        %1420 = vperm.xlu0 %1419, %v1409
        %v1421 = vpop.permute.xlu0 %1420
        %v1422 = vperm.slane %v1200, 0
        %v1423 = vlaneseq
        %v1424 = vshrl.u32 %v1423, 7
        %1426 = vset.pattern.permute.xlu0 %v1424
        %1427 = vperm.xlu0 %1426, %v1422
        %v1428 = vpop.permute.xlu0 %1427
        %v1429 = vlaneseq
        %v1430 = vshrl.u32 %v1429, 7
        %v1431 = vadd.s32 %v1430, 8
        %1432 = vset.pattern.permute.xlu0 %v1431
        %1433 = vperm.xlu0 %1432, %v1422
        %v1434 = vpop.permute.xlu0 %1433
        %v1435 = vperm.slane %v1200, 1
        %v1436 = vlaneseq
        %v1437 = vshrl.u32 %v1436, 7
        %1439 = vset.pattern.permute.xlu0 %v1437
        %1440 = vperm.xlu0 %1439, %v1435
        %v1441 = vpop.permute.xlu0 %1440
        %v1442 = vlaneseq
        %v1443 = vshrl.u32 %v1442, 7
        %v1444 = vadd.s32 %v1443, 8
        %1445 = vset.pattern.permute.xlu0 %v1444
        %1446 = vperm.xlu0 %1445, %v1435
        %v1447 = vpop.permute.xlu0 %1446
        %v1448 = vperm.slane %v1200, 2
        %v1449 = vlaneseq
        %v1450 = vshrl.u32 %v1449, 7
        %1452 = vset.pattern.permute.xlu0 %v1450
        %1453 = vperm.xlu0 %1452, %v1448
        %v1454 = vpop.permute.xlu0 %1453
        %v1455 = vlaneseq
        %v1456 = vshrl.u32 %v1455, 7
        %v1457 = vadd.s32 %v1456, 8
        %1458 = vset.pattern.permute.xlu0 %v1457
        %1459 = vperm.xlu0 %1458, %v1448
        %v1460 = vpop.permute.xlu0 %1459
        %v1461 = vperm.slane %v1200, 3
        %v1462 = vlaneseq
        %v1463 = vshrl.u32 %v1462, 7
        %1465 = vset.pattern.permute.xlu0 %v1463
        %1466 = vperm.xlu0 %1465, %v1461
        %v1467 = vpop.permute.xlu0 %1466
        %v1468 = vlaneseq
        %v1469 = vshrl.u32 %v1468, 7
        %v1470 = vadd.s32 %v1469, 8
        %1471 = vset.pattern.permute.xlu0 %v1470
        %1472 = vperm.xlu0 %1471, %v1461
        %v1473 = vpop.permute.xlu0 %1472
        %v1474 = vperm.slane %v1200, 4
        %v1475 = vlaneseq
        %v1476 = vshrl.u32 %v1475, 7
        %1478 = vset.pattern.permute.xlu0 %v1476
        %1479 = vperm.xlu0 %1478, %v1474
        %v1480 = vpop.permute.xlu0 %1479
        %v1481 = vlaneseq
        %v1482 = vshrl.u32 %v1481, 7
        %v1483 = vadd.s32 %v1482, 8
        %1484 = vset.pattern.permute.xlu0 %v1483
        %1485 = vperm.xlu0 %1484, %v1474
        %v1486 = vpop.permute.xlu0 %1485
        %v1487 = vperm.slane %v1200, 5
        %v1488 = vlaneseq
        %v1489 = vshrl.u32 %v1488, 7
        %1491 = vset.pattern.permute.xlu0 %v1489
        %1492 = vperm.xlu0 %1491, %v1487
        %v1493 = vpop.permute.xlu0 %1492
        %v1494 = vlaneseq
        %v1495 = vshrl.u32 %v1494, 7
        %v1496 = vadd.s32 %v1495, 8
        %1497 = vset.pattern.permute.xlu0 %v1496
        %1498 = vperm.xlu0 %1497, %v1487
        %v1499 = vpop.permute.xlu0 %1498
        %v1500 = vperm.slane %v1200, 6
        %v1501 = vlaneseq
        %v1502 = vshrl.u32 %v1501, 7
        %1504 = vset.pattern.permute.xlu0 %v1502
        %1505 = vperm.xlu0 %1504, %v1500
        %v1506 = vpop.permute.xlu0 %1505
        %v1507 = vlaneseq
        %v1508 = vshrl.u32 %v1507, 7
        %v1509 = vadd.s32 %v1508, 8
        %1510 = vset.pattern.permute.xlu0 %v1509
        %1511 = vperm.xlu0 %1510, %v1500
        %v1512 = vpop.permute.xlu0 %1511
        %v1513 = vperm.slane %v1200, 7
        %v1514 = vlaneseq
        %v1515 = vshrl.u32 %v1514, 7
        %1517 = vset.pattern.permute.xlu0 %v1515
        %1518 = vperm.xlu0 %1517, %v1513
        %v1519 = vpop.permute.xlu0 %1518
        %v1520 = vlaneseq
        %v1521 = vshrl.u32 %v1520, 7
        %v1522 = vadd.s32 %v1521, 8
        %1523 = vset.pattern.permute.xlu0 %v1522
        %1524 = vperm.xlu0 %1523, %v1513
        %v1525 = vpop.permute.xlu0 %1524
        %v1526 = vperm.slane %v1204, 0
        %v1527 = vlaneseq
        %v1528 = vshrl.u32 %v1527, 7
        %1530 = vset.pattern.permute.xlu0 %v1528
        %1531 = vperm.xlu0 %1530, %v1526
        %v1532 = vpop.permute.xlu0 %1531
        %v1533 = vlaneseq
        %v1534 = vshrl.u32 %v1533, 7
        %v1535 = vadd.s32 %v1534, 8
        %1536 = vset.pattern.permute.xlu0 %v1535
        %1537 = vperm.xlu0 %1536, %v1526
        %v1538 = vpop.permute.xlu0 %1537
        %v1539 = vperm.slane %v1204, 1
        %v1540 = vlaneseq
        %v1541 = vshrl.u32 %v1540, 7
        %1543 = vset.pattern.permute.xlu0 %v1541
        %1544 = vperm.xlu0 %1543, %v1539
        %v1545 = vpop.permute.xlu0 %1544
        %v1546 = vlaneseq
        %v1547 = vshrl.u32 %v1546, 7
        %v1548 = vadd.s32 %v1547, 8
        %1549 = vset.pattern.permute.xlu0 %v1548
        %1550 = vperm.xlu0 %1549, %v1539
        %v1551 = vpop.permute.xlu0 %1550
        %v1552 = vperm.slane %v1204, 2
        %v1553 = vlaneseq
        %v1554 = vshrl.u32 %v1553, 7
        %1556 = vset.pattern.permute.xlu0 %v1554
        %1557 = vperm.xlu0 %1556, %v1552
        %v1558 = vpop.permute.xlu0 %1557
        %v1559 = vlaneseq
        %v1560 = vshrl.u32 %v1559, 7
        %v1561 = vadd.s32 %v1560, 8
        %1562 = vset.pattern.permute.xlu0 %v1561
        %1563 = vperm.xlu0 %1562, %v1552
        %v1564 = vpop.permute.xlu0 %1563
        %v1565 = vperm.slane %v1204, 3
        %v1566 = vlaneseq
        %v1567 = vshrl.u32 %v1566, 7
        %1569 = vset.pattern.permute.xlu0 %v1567
        %1570 = vperm.xlu0 %1569, %v1565
        %v1571 = vpop.permute.xlu0 %1570
        %v1572 = vlaneseq
        %v1573 = vshrl.u32 %v1572, 7
        %v1574 = vadd.s32 %v1573, 8
        %1575 = vset.pattern.permute.xlu0 %v1574
        %1576 = vperm.xlu0 %1575, %v1565
        %v1577 = vpop.permute.xlu0 %1576
        %v1578 = vperm.slane %v1204, 4
        %v1579 = vlaneseq
        %v1580 = vshrl.u32 %v1579, 7
        %1582 = vset.pattern.permute.xlu0 %v1580
        %1583 = vperm.xlu0 %1582, %v1578
        %v1584 = vpop.permute.xlu0 %1583
        %v1585 = vlaneseq
        %v1586 = vshrl.u32 %v1585, 7
        %v1587 = vadd.s32 %v1586, 8
        %1588 = vset.pattern.permute.xlu0 %v1587
        %1589 = vperm.xlu0 %1588, %v1578
        %v1590 = vpop.permute.xlu0 %1589
        %v1591 = vperm.slane %v1204, 5
        %v1592 = vlaneseq
        %v1593 = vshrl.u32 %v1592, 7
        %1595 = vset.pattern.permute.xlu0 %v1593
        %1596 = vperm.xlu0 %1595, %v1591
        %v1597 = vpop.permute.xlu0 %1596
        %v1598 = vlaneseq
        %v1599 = vshrl.u32 %v1598, 7
        %v1600 = vadd.s32 %v1599, 8
        %1601 = vset.pattern.permute.xlu0 %v1600
        %1602 = vperm.xlu0 %1601, %v1591
        %v1603 = vpop.permute.xlu0 %1602
        %v1604 = vperm.slane %v1204, 6
        %v1605 = vlaneseq
        %v1606 = vshrl.u32 %v1605, 7
        %1608 = vset.pattern.permute.xlu0 %v1606
        %1609 = vperm.xlu0 %1608, %v1604
        %v1610 = vpop.permute.xlu0 %1609
        %v1611 = vlaneseq
        %v1612 = vshrl.u32 %v1611, 7
        %v1613 = vadd.s32 %v1612, 8
        %1614 = vset.pattern.permute.xlu0 %v1613
        %1615 = vperm.xlu0 %1614, %v1604
        %v1616 = vpop.permute.xlu0 %1615
        %v1617 = vperm.slane %v1204, 7
        %v1618 = vlaneseq
        %v1619 = vshrl.u32 %v1618, 7
        %1621 = vset.pattern.permute.xlu0 %v1619
        %1622 = vperm.xlu0 %1621, %v1617
        %v1623 = vpop.permute.xlu0 %1622
        %v1624 = vlaneseq
        %v1625 = vshrl.u32 %v1624, 7
        %v1626 = vadd.s32 %v1625, 8
        %1627 = vset.pattern.permute.xlu0 %v1626
        %1628 = vperm.xlu0 %1627, %v1617
        %v1629 = vpop.permute.xlu0 %1628
        %vm1630 = vcmask 7168
        %v1631 = vsel %vm1630, %v1220, %v1324
        %v1632 = vsel %vm1630, %v1226, %v1330
        %v1633 = vsel %vm1630, %v1233, %v1337
        %v1634 = vsel %vm1630, %v1239, %v1343
        %v1635 = vsel %vm1630, %v1246, %v1350
        %v1636 = vsel %vm1630, %v1252, %v1356
        %v1637 = vsel %vm1630, %v1259, %v1363
        %v1638 = vsel %vm1630, %v1265, %v1369
        %v1639 = vsel %vm1630, %v1272, %v1376
        %v1640 = vsel %vm1630, %v1278, %v1382
        %v1641 = vsel %vm1630, %v1285, %v1389
        %v1642 = vsel %vm1630, %v1291, %v1395
        %v1643 = vsel %vm1630, %v1298, %v1402
        %v1644 = vsel %vm1630, %v1304, %v1408
        %v1645 = vsel %vm1630, %v1311, %v1415
        %v1646 = vsel %vm1630, %v1317, %v1421
        %vm1647 = vcmask 15360
        %v1648 = vsel %vm1647, %v1631, %v1428
        %v1649 = vsel %vm1647, %v1632, %v1434
        %v1650 = vsel %vm1647, %v1633, %v1441
        %v1651 = vsel %vm1647, %v1634, %v1447
        %v1652 = vsel %vm1647, %v1635, %v1454
        %v1653 = vsel %vm1647, %v1636, %v1460
        %v1654 = vsel %vm1647, %v1637, %v1467
        %v1655 = vsel %vm1647, %v1638, %v1473
        %v1656 = vsel %vm1647, %v1639, %v1480
        %v1657 = vsel %vm1647, %v1640, %v1486
        %v1658 = vsel %vm1647, %v1641, %v1493
        %v1659 = vsel %vm1647, %v1642, %v1499
        %v1660 = vsel %vm1647, %v1643, %v1506
        %v1661 = vsel %vm1647, %v1644, %v1512
        %v1662 = vsel %vm1647, %v1645, %v1519
        %v1663 = vsel %vm1647, %v1646, %v1525
        %vm1664 = vcmask 23552
        %v1665 = vsel %vm1664, %v1648, %v1532
        %v1666 = vsel %vm1664, %v1649, %v1538
        %v1667 = vsel %vm1664, %v1650, %v1545
        %v1668 = vsel %vm1664, %v1651, %v1551
        %v1669 = vsel %vm1664, %v1652, %v1558
        %v1670 = vsel %vm1664, %v1653, %v1564
        %v1671 = vsel %vm1664, %v1654, %v1571
        %v1672 = vsel %vm1664, %v1655, %v1577
        %v1673 = vsel %vm1664, %v1656, %v1584
        %v1674 = vsel %vm1664, %v1657, %v1590
        %v1675 = vsel %vm1664, %v1658, %v1597
        %v1676 = vsel %vm1664, %v1659, %v1603
        %v1677 = vsel %vm1664, %v1660, %v1610
        %v1678 = vsel %vm1664, %v1661, %v1616
        %v1679 = vsel %vm1664, %v1662, %v1623
        %v1680 = vsel %vm1664, %v1663, %v1629
        %v1681 = vld [vmem:[#allocation17] sm:$0xff]
        %vm1682 = vcmask 31744
        %v1684 = vsel %vm1682, %v1665, 0
        %v1687 = vsel %vm1682, %v1666, 0
        %v1690 = vsel %vm1682, %v1667, 0
        %v1693 = vsel %vm1682, %v1668, 0
        %v1696 = vsel %vm1682, %v1669, 0
        %v1699 = vsel %vm1682, %v1670, 0
        %v1702 = vsel %vm1682, %v1671, 0
        %v1705 = vsel %vm1682, %v1672, 0
        %v1708 = vsel %vm1682, %v1673, 0
        %v1711 = vsel %vm1682, %v1674, 0
        %v1714 = vsel %vm1682, %v1675, 0
        %v1717 = vsel %vm1682, %v1676, 0
        %v1720 = vsel %vm1682, %v1677, 0
        %v1723 = vsel %vm1682, %v1678, 0
        %v1726 = vsel %vm1682, %v1679, 0
        %v1729 = vsel %vm1682, %v1680, 0
        %vm1731 = vcmask 1043456
        %v1733 = vsel %vm1731, %v1681, 0
        %1735 = vmatpush.msra.mxu0 0.0
        %1736 = vmatpush.msra.mxu0 0.0
        %1737 = vmatpush.msra.mxu0 0.0
        %1738 = vmatpush.msra.mxu0 0.0
        %1739 = vmatpush.msra.mxu0 0.0
        %1740 = vmatpush.msra.mxu0 0.0
        %1741 = vmatpush.msra.mxu0 0.0
        %1742 = vmatpush.msra.mxu0 0.0
        %1743 = vmatpush.msra.mxu0 0.0
        %1744 = vmatpush.msra.mxu0 0.0
        %1745 = vmatpush.msra.mxu0 0.0
        %1746 = vmatpush.msra.mxu0 0.0
        %1747 = vmatpush.msra.mxu0 0.0
        %1748 = vmatpush.msra.mxu0 0.0
        %1749 = vmatpush.msra.mxu0 0.0
        %1750 = vmatpush.msra.mxu0 %v1733
        %1751 = vmatmul.f32.gmra.mxu0 %v1684
        %v1752 = vpop.f32.mrf.mxu0
        %v1753 = vadd.f32 0.0, %v1752
        %1754 = vmatmul.f32.gmra.mxu0 %v1687
        %v1755 = vpop.f32.mrf.mxu0
        %v1756 = vadd.f32 0.0, %v1755
        %1757 = vmatmul.f32.gmra.mxu0 %v1690
        %v1758 = vpop.f32.mrf.mxu0
        %v1759 = vadd.f32 0.0, %v1758
        %1760 = vmatmul.f32.gmra.mxu0 %v1693
        %v1761 = vpop.f32.mrf.mxu0
        %v1762 = vadd.f32 0.0, %v1761
        %1763 = vmatmul.f32.gmra.mxu0 %v1696
        %v1764 = vpop.f32.mrf.mxu0
        %v1765 = vadd.f32 0.0, %v1764
        %1766 = vmatmul.f32.gmra.mxu0 %v1699
        %v1767 = vpop.f32.mrf.mxu0
        %v1768 = vadd.f32 0.0, %v1767
        %1769 = vmatmul.f32.gmra.mxu0 %v1702
        %v1770 = vpop.f32.mrf.mxu0
        %v1771 = vadd.f32 0.0, %v1770
        %1772 = vmatmul.f32.gmra.mxu0 %v1705
        %v1773 = vpop.f32.mrf.mxu0
        %v1774 = vadd.f32 0.0, %v1773
        %1775 = vmatmul.f32.gmra.mxu0 %v1708
        %v1776 = vpop.f32.mrf.mxu0
        %v1777 = vadd.f32 0.0, %v1776
        %1778 = vmatmul.f32.gmra.mxu0 %v1711
        %v1779 = vpop.f32.mrf.mxu0
        %v1780 = vadd.f32 0.0, %v1779
        %1781 = vmatmul.f32.gmra.mxu0 %v1714
        %v1782 = vpop.f32.mrf.mxu0
        %v1783 = vadd.f32 0.0, %v1782
        %1784 = vmatmul.f32.gmra.mxu0 %v1717
        %v1785 = vpop.f32.mrf.mxu0
        %v1786 = vadd.f32 0.0, %v1785
        %1787 = vmatmul.f32.gmra.mxu0 %v1720
        %v1788 = vpop.f32.mrf.mxu0
        %v1789 = vadd.f32 0.0, %v1788
        %1790 = vmatmul.f32.gmra.mxu0 %v1723
        %v1791 = vpop.f32.mrf.mxu0
        %v1792 = vadd.f32 0.0, %v1791
        %1793 = vmatmul.f32.gmra.mxu0 %v1726
        %v1794 = vpop.f32.mrf.mxu0
        %v1795 = vadd.f32 0.0, %v1794
        %1796 = vmatmul.f32.gmra.mxu0 %v1729
        %v1797 = vpop.f32.mrf.mxu0
        %v1798 = vadd.f32 0.0, %v1797
        %1799 = vdwg.mxu0
        %s1800 = smul.u32 %s1095, 2
        %s1801 = smul.addr %s1800, 8
        %s1802 = scalar_lea.vmem [#allocation2], %s1801
        %v1803 = vld [vmem:[%s1802] sm:$0xff]
        %v1804 = vld [vmem:[#allocation3] sm:$0xff]
        %v1805 = vld [vmem:[#allocation3 + $0x10] sm:$0xff]
        %v1807 = vrot.slane %v1803, 1
        %v1808 = vrot.slane %v1803, 2
        %v1809 = vrot.slane %v1803, 3
        %v1810 = vrot.slane %v1803, 4
        %v1811 = vrot.slane %v1803, 5
        %v1812 = vrot.slane %v1803, 6
        %v1813 = vrot.slane %v1803, 7
        %v1814 = vperm.slane %v1803, 0
        %v1815 = vperm.slane %v1807, 0
        %v1816 = vperm.slane %v1808, 0
        %v1817 = vperm.slane %v1809, 0
        %v1818 = vperm.slane %v1810, 0
        %v1819 = vperm.slane %v1811, 0
        %v1820 = vperm.slane %v1812, 0
        %v1821 = vperm.slane %v1813, 0
        %v1830 = vadd.f32 %v1814, %v1804
        %v1831 = vadd.f32 %v1814, %v1805
        %v1832 = vadd.f32 %v1815, %v1804
        %v1833 = vadd.f32 %v1815, %v1805
        %v1834 = vadd.f32 %v1816, %v1804
        %v1835 = vadd.f32 %v1816, %v1805
        %v1836 = vadd.f32 %v1817, %v1804
        %v1837 = vadd.f32 %v1817, %v1805
        %v1838 = vadd.f32 %v1818, %v1804
        %v1839 = vadd.f32 %v1818, %v1805
        %v1840 = vadd.f32 %v1819, %v1804
        %v1841 = vadd.f32 %v1819, %v1805
        %v1842 = vadd.f32 %v1820, %v1804
        %v1843 = vadd.f32 %v1820, %v1805
        %v1844 = vadd.f32 %v1821, %v1804
        %v1845 = vadd.f32 %v1821, %v1805
        %v1846 = vadd.f32 %v1830, %v1753
        %v1847 = vadd.f32 %v1831, %v1756
        %v1848 = vadd.f32 %v1832, %v1759
        %v1849 = vadd.f32 %v1833, %v1762
        %v1850 = vadd.f32 %v1834, %v1765
        %v1851 = vadd.f32 %v1835, %v1768
        %v1852 = vadd.f32 %v1836, %v1771
        %v1853 = vadd.f32 %v1837, %v1774
        %v1854 = vadd.f32 %v1838, %v1777
        %v1855 = vadd.f32 %v1839, %v1780
        %v1856 = vadd.f32 %v1840, %v1783
        %v1857 = vadd.f32 %v1841, %v1786
        %v1858 = vadd.f32 %v1842, %v1789
        %v1859 = vadd.f32 %v1843, %v1792
        %v1860 = vadd.f32 %v1844, %v1795
        %v1861 = vadd.f32 %v1845, %v1798
        %v1862 = vmax.f32 %v1846, 0.0
        %v1863 = vmax.f32 %v1847, 0.0
        %v1864 = vmax.f32 %v1848, 0.0
        %v1865 = vmax.f32 %v1849, 0.0
        %v1866 = vmax.f32 %v1850, 0.0
        %v1867 = vmax.f32 %v1851, 0.0
        %v1868 = vmax.f32 %v1852, 0.0
        %v1869 = vmax.f32 %v1853, 0.0
        %v1870 = vmax.f32 %v1854, 0.0
        %v1871 = vmax.f32 %v1855, 0.0
        %v1872 = vmax.f32 %v1856, 0.0
        %v1873 = vmax.f32 %v1857, 0.0
        %v1874 = vmax.f32 %v1858, 0.0
        %v1875 = vmax.f32 %v1859, 0.0
        %v1876 = vmax.f32 %v1860, 0.0
        %v1877 = vmax.f32 %v1861, 0.0
        %v1878 = vld [vmem:[%s12] sm:$0x1]
        %v1880 = vperm.slane %v1878, 0
        %v1882 = vmul.f32 %v1862, %v1880
        %v1883 = vmul.f32 %v1863, %v1880
        %v1884 = vmul.f32 %v1864, %v1880
        %v1885 = vmul.f32 %v1865, %v1880
        %v1886 = vmul.f32 %v1866, %v1880
        %v1887 = vmul.f32 %v1867, %v1880
        %v1888 = vmul.f32 %v1868, %v1880
        %v1889 = vmul.f32 %v1869, %v1880
        %v1890 = vmul.f32 %v1870, %v1880
        %v1891 = vmul.f32 %v1871, %v1880
        %v1892 = vmul.f32 %v1872, %v1880
        %v1893 = vmul.f32 %v1873, %v1880
        %v1894 = vmul.f32 %v1874, %v1880
        %v1895 = vmul.f32 %v1875, %v1880
        %v1896 = vmul.f32 %v1876, %v1880
        %v1897 = vmul.f32 %v1877, %v1880
        %1898 = vadd.xlane.f32.xlu0 %v1882
        %v1899 = vpop.xlane.xlu0 %1898
        %1900 = vadd.xlane.f32.xlu0 %v1883
        %v1901 = vpop.xlane.xlu0 %1900
        %1902 = vadd.xlane.f32.xlu0 %v1884
        %v1903 = vpop.xlane.xlu0 %1902
        %1904 = vadd.xlane.f32.xlu0 %v1885
        %v1905 = vpop.xlane.xlu0 %1904
        %1906 = vadd.xlane.f32.xlu0 %v1886
        %v1907 = vpop.xlane.xlu0 %1906
        %1908 = vadd.xlane.f32.xlu0 %v1887
        %v1909 = vpop.xlane.xlu0 %1908
        %1910 = vadd.xlane.f32.xlu0 %v1888
        %v1911 = vpop.xlane.xlu0 %1910
        %1912 = vadd.xlane.f32.xlu0 %v1889
        %v1913 = vpop.xlane.xlu0 %1912
        %1914 = vadd.xlane.f32.xlu0 %v1890
        %v1915 = vpop.xlane.xlu0 %1914
        %1916 = vadd.xlane.f32.xlu0 %v1891
        %v1917 = vpop.xlane.xlu0 %1916
        %1918 = vadd.xlane.f32.xlu0 %v1892
        %v1919 = vpop.xlane.xlu0 %1918
        %1920 = vadd.xlane.f32.xlu0 %v1893
        %v1921 = vpop.xlane.xlu0 %1920
        %1922 = vadd.xlane.f32.xlu0 %v1894
        %v1923 = vpop.xlane.xlu0 %1922
        %1924 = vadd.xlane.f32.xlu0 %v1895
        %v1925 = vpop.xlane.xlu0 %1924
        %1926 = vadd.xlane.f32.xlu0 %v1896
        %v1927 = vpop.xlane.xlu0 %1926
        %1928 = vadd.xlane.f32.xlu0 %v1897
        %v1929 = vpop.xlane.xlu0 %1928
        %v1930 = vld [vmem:[#allocation9] sm:$0x1]
        %v1932 = vperm.slane %v1930, 0
        %1933 = vset.pattern.permute.xlu0 0
        %1934 = vperm.xlu0 %1933, %v1932
        %v1935 = vpop.permute.xlu0 %1934
        %v1937 = vadd.f32 %v1899, %v1935
        %v1938 = vadd.f32 %v1901, %v1935
        %v1939 = vadd.f32 %v1903, %v1935
        %v1940 = vadd.f32 %v1905, %v1935
        %v1941 = vadd.f32 %v1907, %v1935
        %v1942 = vadd.f32 %v1909, %v1935
        %v1943 = vadd.f32 %v1911, %v1935
        %v1944 = vadd.f32 %v1913, %v1935
        %v1945 = vadd.f32 %v1915, %v1935
        %v1946 = vadd.f32 %v1917, %v1935
        %v1947 = vadd.f32 %v1919, %v1935
        %v1948 = vadd.f32 %v1921, %v1935
        %v1949 = vadd.f32 %v1923, %v1935
        %v1950 = vadd.f32 %v1925, %v1935
        %v1951 = vadd.f32 %v1927, %v1935
        %v1952 = vadd.f32 %v1929, %v1935
        %v1969 = vlaneseq
        %v1970 = vand.u32 %v1969, 127
        %v1971 = vperm.slane %v1937, %v1970
        %v1972 = vadd.s32 %v1970, 4294967288
        %v1973 = vperm.slane %v1938, %v1972
        %vm1974 = vcmask 130112
        %v1975 = vsel %vm1974, %v1973, %v1971
        %v1976 = vperm.slane %v1939, %v1970
        %v1977 = vperm.slane %v1940, %v1972
        %v1978 = vsel %vm1974, %v1977, %v1976
        %v1979 = vperm.slane %v1941, %v1970
        %v1980 = vperm.slane %v1942, %v1972
        %v1981 = vsel %vm1974, %v1980, %v1979
        %v1982 = vperm.slane %v1943, %v1970
        %v1983 = vperm.slane %v1944, %v1972
        %v1984 = vsel %vm1974, %v1983, %v1982
        %v1985 = vperm.slane %v1945, %v1970
        %v1986 = vperm.slane %v1946, %v1972
        %v1987 = vsel %vm1974, %v1986, %v1985
        %v1988 = vperm.slane %v1947, %v1970
        %v1989 = vperm.slane %v1948, %v1972
        %v1990 = vsel %vm1974, %v1989, %v1988
        %v1991 = vperm.slane %v1949, %v1970
        %v1992 = vperm.slane %v1950, %v1972
        %v1993 = vsel %vm1974, %v1992, %v1991
        %v1994 = vperm.slane %v1951, %v1970
        %v1995 = vperm.slane %v1952, %v1972
        %v1996 = vsel %vm1974, %v1995, %v1994
        %vm1997 = vcmask 1041409
        %v1998 = vsel %vm1997, %v1978, %v1975
        %vm1999 = vcmask 1042434
        %v2000 = vsel %vm1999, %v1981, %v1998
        %vm2001 = vcmask 1043459
        %v2002 = vsel %vm2001, %v1984, %v2000
        %vm2003 = vcmask 1044484
        %v2004 = vsel %vm2003, %v1987, %v2002
        %vm2005 = vcmask 1045509
        %v2006 = vsel %vm2005, %v1990, %v2004
        %vm2007 = vcmask 1046534
        %v2008 = vsel %vm2007, %v1993, %v2006
        %vm2009 = vcmask 1047559
        %v2010 = vsel %vm2009, %v1996, %v2008
        %s2012 = scalar_lea.vmem [#allocation4], %s785
        %2013 = vst.msk [vmem:[%s2012] sm:$0xff] %vm1206, %v2010
        %p2014 = scmp.eq.s32.totalorder %s43, 1
        // Predicated region
        $region117: #{tpu_custom_call.1} parent=91 // pred_check
          %p2015 = pneg %p2014
        $region118: #{tpu_custom_call.1} parent=91 // pred_check_branch
          %2017 = sbr.rel (%p2015) target = $region120
        $region119: #{tpu_custom_call.1} parent=91 // pred_region
          %v2018 = vld [vmem:[#allocation4] sm:$0xff]
          %v2019 = vld [vmem:[#allocation4 + $0x8] sm:$0xff]
          %v2020 = vsel %vm1206, %v2018, -inf
          %2021 = vmax.xlane.f32.xlu0 %v2020
          %v2022 = vpop.xlane.xlu0 %2021
          %v2023 = vsel %vm1206, %v2019, -inf
          %2024 = vmax.xlane.f32.xlu0 %v2023
          %v2025 = vpop.xlane.xlu0 %2024
          %vm2026 = vcmp.eq.f32.partialorder %v2018, %v2022
          %vm2027 = vcmp.eq.f32.partialorder %v2019, %v2025
          %v2028 = vsel %vm2026, %v1970, 16
          %v2029 = vsel %vm2027, %v1970, 16
          %v2030 = vsel %vm1206, %v2028, 2147483647
          %v2031 = vand.u32 %v2030, 65535
          %v2032 = vshra.s32 %v2030, 16
          %v2033 = vcvt.s32.f32 %v2031
          %v2034 = vcvt.s32.f32 %v2032
          %2035 = vmin.xlane.f32.xlu0 %v2034
          %v2036 = vpop.xlane.xlu0 %2035
          %vm2037 = vcmp.eq.f32.partialorder %v2034, %v2036
          %v2038 = vsel %vm2037, %v2033, inf
          %2039 = vmin.xlane.f32.xlu0 %v2038
          %v2040 = vpop.xlane.xlu0 %2039
          %v2041 = vcvt.f32.s32 %v2040
          %v2042 = vcvt.f32.s32 %v2036
          %v2043 = vshll.u32 %v2042, 16
          %v2044 = vadd.s32 %v2043, %v2041
          %v2045 = vsel %vm1206, %v2029, 2147483647
          %v2046 = vand.u32 %v2045, 65535
          %v2047 = vshra.s32 %v2045, 16
          %v2048 = vcvt.s32.f32 %v2046
          %v2049 = vcvt.s32.f32 %v2047
          %2050 = vmin.xlane.f32.xlu0 %v2049
          %v2051 = vpop.xlane.xlu0 %2050
          %vm2052 = vcmp.eq.f32.partialorder %v2049, %v2051
          %v2053 = vsel %vm2052, %v2048, inf
          %2054 = vmin.xlane.f32.xlu0 %v2053
          %v2055 = vpop.xlane.xlu0 %2054
          %v2056 = vcvt.f32.s32 %v2055
          %v2057 = vcvt.f32.s32 %v2051
          %v2058 = vshll.u32 %v2057, 16
          %v2059 = vadd.s32 %v2058, %v2056
          %vm2060 = vcmp.eq.s32.totalorder %v1970, %v2044
          %vm2061 = vcmp.eq.s32.totalorder %v1970, %v2059
          %v2062 = vsel %vm2060, 1, 0
          %v2063 = vsel %vm2061, 1, 0
          %v2064 = vcvt.s32.f32 %v2062
          %v2065 = vcvt.s32.f32 %v2063
          %2066 = vst.msk [vmem:[%s778] sm:$0xff] %vm1630, %v2022
          %2067 = vst.msk [vmem:[%s778 + $0x8] sm:$0xff] %vm1630, %v2025
          %v2068 = vld [vmem:[#allocation2 + $0x8] sm:$0xff]
          %v2069 = vld [vmem:[#allocation2 + $0x18] sm:$0xff]
          %v2070 = vld [vmem:[#allocation3 + $0x8] sm:$0xff]
          %v2071 = vld [vmem:[#allocation3 + $0x18] sm:$0xff]
          %v2073 = vsel %vm1206, %v2064, 0
          %v2076 = vsel %vm1206, %v2065, 0
          %2078 = vmatpush.msra.mxu0 0.0
          %2079 = vmatpush.msra.mxu0 0.0
          %2080 = vmatpush.msra.mxu0 0.0
          %2081 = vmatpush.msra.mxu0 0.0
          %2082 = vmatpush.msra.mxu0 0.0
          %2083 = vmatpush.msra.mxu0 0.0
          %2084 = vmatpush.msra.mxu0 0.0
          %2085 = vmatpush.msra.mxu0 0.0
          %2086 = vmatpush.msra.mxu0 0.0
          %2087 = vmatpush.msra.mxu0 0.0
          %2088 = vmatpush.msra.mxu0 0.0
          %2089 = vmatpush.msra.mxu0 0.0
          %2090 = vmatpush.msra.mxu0 0.0
          %2091 = vmatpush.msra.mxu0 0.0
          %2092 = vmatpush.msra.mxu0 %v2071
          %2093 = vmatpush.msra.mxu0 %v2070
          %2094 = vmatmul.f32.gmra.mxu0 %v2073
          %v2095 = vpop.f32.mrf.mxu0
          %v2096 = vadd.f32 0.0, %v2095
          %2097 = vmatmul.f32.gmra.mxu0 %v2076
          %v2098 = vpop.f32.mrf.mxu0
          %v2099 = vadd.f32 0.0, %v2098
          %2100 = vdwg.mxu0
          %v2101 = vld [vmem:[#allocation5] sm:$0xff]
          %v2102 = vld [vmem:[#allocation5 + $0x8] sm:$0xff]
          %v2103 = vmul.f32 %v2064, %v2101
          %v2104 = vmul.f32 %v2065, %v2102
          %v2105 = vsel %vm1206, %v2103, 0.0
          %2106 = vadd.xlane.f32.xlu0 %v2105
          %v2107 = vpop.xlane.xlu0 %2106
          %v2108 = vsel %vm1206, %v2104, 0.0
          %2109 = vadd.xlane.f32.xlu0 %v2108
          %v2110 = vpop.xlane.xlu0 %2109
          %v2111 = vld [vmem:[#allocation6] sm:$0xff]
          %v2112 = vld [vmem:[#allocation6 + $0x8] sm:$0xff]
          %v2113 = vmul.f32 %v2064, %v2111
          %v2114 = vmul.f32 %v2065, %v2112
          %v2115 = vsel %vm1206, %v2113, 0.0
          %2116 = vadd.xlane.f32.xlu0 %v2115
          %v2117 = vpop.xlane.xlu0 %2116
          %v2118 = vsel %vm1206, %v2114, 0.0
          %2119 = vadd.xlane.f32.xlu0 %v2118
          %v2120 = vpop.xlane.xlu0 %2119
          %v2121 = vld [vmem:[#allocation7] sm:$0xff]
          %v2122 = vld [vmem:[#allocation7 + $0x8] sm:$0xff]
          %v2123 = vmul.f32 %v2064, %v2121
          %v2124 = vmul.f32 %v2065, %v2122
          %v2125 = vsel %vm1206, %v2123, 0.0
          %2126 = vadd.xlane.f32.xlu0 %v2125
          %v2127 = vpop.xlane.xlu0 %2126
          %v2128 = vsel %vm1206, %v2124, 0.0
          %2129 = vadd.xlane.f32.xlu0 %v2128
          %v2130 = vpop.xlane.xlu0 %2129
          %v2131 = vld [vmem:[#allocation8] sm:$0xff]
          %v2132 = vld [vmem:[#allocation8 + $0x8] sm:$0xff]
          %v2133 = vmul.f32 %v2064, %v2131
          %v2134 = vmul.f32 %v2065, %v2132
          %v2135 = vsel %vm1206, %v2133, 0.0
          %2136 = vadd.xlane.f32.xlu0 %v2135
          %v2137 = vpop.xlane.xlu0 %2136
          %v2138 = vsel %vm1206, %v2134, 0.0
          %2139 = vadd.xlane.f32.xlu0 %v2138
          %v2140 = vpop.xlane.xlu0 %2139
          %v2141 = vsel %vm1630, %v2107, %v2117
          %v2142 = vsel %vm1630, %v2110, %v2120
          %v2143 = vsel %vm1647, %v2141, %v2127
          %v2144 = vsel %vm1647, %v2142, %v2130
          %v2145 = vsel %vm1664, %v2143, %v2137
          %v2146 = vsel %vm1664, %v2144, %v2140
          %v2147 = vld [vmem:[#allocation17] sm:$0xff]
          %2149 = vst [vmem:[#allocation1] ss:$2 sm:$0xff] %v2147
          %v2150 = vld.sshfl [vmem:[#allocation1 + $0x8] sm:$0xff pattern:$0x75316420]
          %v2152 = vsel %vm1682, %v2145, 0
          %v2155 = vsel %vm1682, %v2146, 0
          %v2157 = vsel %vm1731, %v2150, 0
          %2159 = vmatpush.msra.mxu0 0.0
          %2160 = vmatpush.msra.mxu0 0.0
          %2161 = vmatpush.msra.mxu0 0.0
          %2162 = vmatpush.msra.mxu0 0.0
          %2163 = vmatpush.msra.mxu0 0.0
          %2164 = vmatpush.msra.mxu0 0.0
          %2165 = vmatpush.msra.mxu0 0.0
          %2166 = vmatpush.msra.mxu0 0.0
          %2167 = vmatpush.msra.mxu0 0.0
          %2168 = vmatpush.msra.mxu0 0.0
          %2169 = vmatpush.msra.mxu0 0.0
          %2170 = vmatpush.msra.mxu0 0.0
          %2171 = vmatpush.msra.mxu0 0.0
          %2172 = vmatpush.msra.mxu0 0.0
          %2173 = vmatpush.msra.mxu0 0.0
          %2174 = vmatpush.msra.mxu0 %v2157
          %2175 = vmatmul.f32.gmra.mxu0 %v2152
          %v2176 = vpop.f32.mrf.mxu0
          %v2177 = vadd.f32 0.0, %v2176
          %2178 = vmatmul.f32.gmra.mxu0 %v2155
          %v2179 = vpop.f32.mrf.mxu0
          %v2180 = vadd.f32 0.0, %v2179
          %2181 = vdwg.mxu0
          %v2182 = vadd.f32 %v2068, %v2096
          %v2183 = vadd.f32 %v2069, %v2099
          %v2184 = vadd.f32 %v2182, %v2177
          %v2185 = vadd.f32 %v2183, %v2180
          %v2186 = vmax.f32 %v2184, 0.0
          %v2187 = vmax.f32 %v2185, 0.0
          %v2188 = vpack.c.bf16 %v2187, %v2186
          %v2189 = vld [vmem:[%s14] sm:$0xf]
          %v2190 = vld [vmem:[%s14 + $0x4] sm:$0xf]
          %v2191 = vld [vmem:[%s14 + $0x8] sm:$0xf]
          %v2192 = vld [vmem:[%s14 + $0xc] sm:$0xf]
          %v2193 = vld [vmem:[%s14 + $0x10] sm:$0xf]
          %v2194 = vld [vmem:[%s14 + $0x14] sm:$0xf]
          %v2195 = vld [vmem:[%s14 + $0x18] sm:$0xf]
          %v2196 = vld [vmem:[%s14 + $0x1c] sm:$0xf]
          %v2197 = vld [vmem:[%s14 + $0x20] sm:$0xf]
          %v2198 = vld [vmem:[%s14 + $0x24] sm:$0xf]
          %v2199 = vld [vmem:[%s14 + $0x28] sm:$0xf]
          %v2200 = vld [vmem:[%s14 + $0x2c] sm:$0xf]
          %v2201 = vld [vmem:[%s14 + $0x30] sm:$0xf]
          %v2202 = vld [vmem:[%s14 + $0x34] sm:$0xf]
          %v2203 = vld [vmem:[%s14 + $0x38] sm:$0xf]
          %v2204 = vld [vmem:[%s14 + $0x3c] sm:$0xf]
          %v2205 = vld [vmem:[%s15] sm:$0x1]
          %v2207 = vperm.slane %v2205, 0
          %v2225 = vunpack.c.l.b16 %v2189
          %v2226 = vunpack.c.l.b16 %v2190
          %v2227 = vunpack.c.l.b16 %v2191
          %v2228 = vunpack.c.l.b16 %v2192
          %v2229 = vunpack.c.l.b16 %v2193
          %v2230 = vunpack.c.l.b16 %v2194
          %v2231 = vunpack.c.l.b16 %v2195
          %v2232 = vunpack.c.l.b16 %v2196
          %v2233 = vunpack.c.l.b16 %v2197
          %v2234 = vunpack.c.l.b16 %v2198
          %v2235 = vunpack.c.l.b16 %v2199
          %v2236 = vunpack.c.l.b16 %v2200
          %v2237 = vunpack.c.l.b16 %v2201
          %v2238 = vunpack.c.l.b16 %v2202
          %v2239 = vunpack.c.l.b16 %v2203
          %v2240 = vunpack.c.l.b16 %v2204
          %v2241 = vpack.c.b16 %v2226, %v2225
          %v2242 = vpack.c.b16 %v2228, %v2227
          %v2243 = vpack.c.b16 %v2230, %v2229
          %v2244 = vpack.c.b16 %v2232, %v2231
          %v2245 = vpack.c.b16 %v2234, %v2233
          %v2246 = vpack.c.b16 %v2236, %v2235
          %v2247 = vpack.c.b16 %v2238, %v2237
          %v2248 = vpack.c.b16 %v2240, %v2239
          %2257 = vmatpush.bf16.msra.mxu0 %v2248
          %2258 = vmatpush.bf16.msra.mxu0 %v2247
          %2259 = vmatpush.bf16.msra.mxu0 %v2246
          %2260 = vmatpush.bf16.msra.mxu0 %v2245
          %2261 = vmatpush.bf16.msra.mxu0 %v2244
          %2262 = vmatpush.bf16.msra.mxu0 %v2243
          %2263 = vmatpush.bf16.msra.mxu0 %v2242
          %2264 = vmatpush.bf16.msra.mxu0 %v2241
          %2265 = vmatmul.bf16.gmra.mxu0 %v2188
          %v2266 = vpop.f32.mrf.mxu0
          %v2267 = vadd.f32 %v2207, %v2266
          %v2268 = vpop.f32.mrf.mxu0
          %v2269 = vadd.f32 %v2207, %v2268
          %2270 = vdwg.mxu0
          %v2271 = vmax.f32 %v2267, 0.0
          %v2272 = vmax.f32 %v2269, 0.0
          %v2273 = vpack.c.bf16 %v2272, %v2271
          %v2274 = vld [vmem:[%s16] sm:$0xf]
          %v2275 = vld [vmem:[%s16 + $0x4] sm:$0xf]
          %v2276 = vld [vmem:[%s16 + $0x8] sm:$0xf]
          %v2277 = vld [vmem:[%s16 + $0xc] sm:$0xf]
          %v2278 = vld [vmem:[%s16 + $0x10] sm:$0xf]
          %v2279 = vld [vmem:[%s16 + $0x14] sm:$0xf]
          %v2280 = vld [vmem:[%s16 + $0x18] sm:$0xf]
          %v2281 = vld [vmem:[%s16 + $0x1c] sm:$0xf]
          %v2282 = vld [vmem:[%s16 + $0x20] sm:$0xf]
          %v2283 = vld [vmem:[%s16 + $0x24] sm:$0xf]
          %v2284 = vld [vmem:[%s16 + $0x28] sm:$0xf]
          %v2285 = vld [vmem:[%s16 + $0x2c] sm:$0xf]
          %v2286 = vld [vmem:[%s16 + $0x30] sm:$0xf]
          %v2287 = vld [vmem:[%s16 + $0x34] sm:$0xf]
          %v2288 = vld [vmem:[%s16 + $0x38] sm:$0xf]
          %v2289 = vld [vmem:[%s16 + $0x3c] sm:$0xf]
          %v2290 = vld [vmem:[%s17] sm:$0x1]
          %v2292 = vperm.slane %v2290, 0
          %v2310 = vunpack.c.l.b16 %v2274
          %v2311 = vunpack.c.l.b16 %v2275
          %v2312 = vunpack.c.l.b16 %v2276
          %v2313 = vunpack.c.l.b16 %v2277
          %v2314 = vunpack.c.l.b16 %v2278
          %v2315 = vunpack.c.l.b16 %v2279
          %v2316 = vunpack.c.l.b16 %v2280
          %v2317 = vunpack.c.l.b16 %v2281
          %v2318 = vunpack.c.l.b16 %v2282
          %v2319 = vunpack.c.l.b16 %v2283
          %v2320 = vunpack.c.l.b16 %v2284
          %v2321 = vunpack.c.l.b16 %v2285
          %v2322 = vunpack.c.l.b16 %v2286
          %v2323 = vunpack.c.l.b16 %v2287
          %v2324 = vunpack.c.l.b16 %v2288
          %v2325 = vunpack.c.l.b16 %v2289
          %v2326 = vpack.c.b16 %v2311, %v2310
          %v2327 = vpack.c.b16 %v2313, %v2312
          %v2328 = vpack.c.b16 %v2315, %v2314
          %v2329 = vpack.c.b16 %v2317, %v2316
          %v2330 = vpack.c.b16 %v2319, %v2318
          %v2331 = vpack.c.b16 %v2321, %v2320
          %v2332 = vpack.c.b16 %v2323, %v2322
          %v2333 = vpack.c.b16 %v2325, %v2324
          %2342 = vmatpush.bf16.msra.mxu0 %v2333
          %2343 = vmatpush.bf16.msra.mxu0 %v2332
          %2344 = vmatpush.bf16.msra.mxu0 %v2331
          %2345 = vmatpush.bf16.msra.mxu0 %v2330
          %2346 = vmatpush.bf16.msra.mxu0 %v2329
          %2347 = vmatpush.bf16.msra.mxu0 %v2328
          %2348 = vmatpush.bf16.msra.mxu0 %v2327
          %2349 = vmatpush.bf16.msra.mxu0 %v2326
          %2350 = vmatmul.bf16.gmra.mxu0 %v2273
          %v2351 = vpop.f32.mrf.mxu0
          %v2352 = vadd.f32 %v2292, %v2351
          %v2353 = vpop.f32.mrf.mxu0
          %v2354 = vadd.f32 %v2292, %v2353
          %2355 = vdwg.mxu0
          %2356 = vst.msk [vmem:[%s783] sm:$0xff] %vm1647, %v2352
          %2357 = vst.msk [vmem:[%s783 + $0x8] sm:$0xff] %vm1647, %v2354
        $region120: #{tpu_custom_call.1} parent=91 // pred_fallthru
          _
        %p2358 = scmp.lt.s32.totalorder %s42, 1
        %s2359 = scalar_select %p2358, %s42, 1
        %s2360 = smul.addr %s2359, 2
        %s2361 = smul.addr %s2360, 8
        %s2362 = scalar_lea.vmem %s18, %s2361
        %p2363 = scmp.lt.s32.totalorder %s42, 1
        %s2364 = scalar_select %p2363, %s42, 1
        %s2365 = smul.addr %s2364, 2
        %s2366 = smul.addr %s2365, 8
        %s2367 = scalar_lea.vmem %s19, %s2366
        // Predicated region
        $region121: #{tpu_custom_call.1} parent=91 // pred_check
          %p2368 = pneg %p471
        $region122: #{tpu_custom_call.1} parent=91 // pred_check_branch
          %2370 = sbr.rel (%p2368) target = $region124
        $region123: #{tpu_custom_call.1} parent=91 // pred_region
          _
        $region124: #{tpu_custom_call.1} parent=91 // pred_fallthru
          _
        // Predicated region
        $region125: #{tpu_custom_call.1} parent=91 // pred_check
          %p2371 = pneg %p497
        $region126: #{tpu_custom_call.1} parent=91 // pred_check_branch
          %2373 = sbr.rel (%p2371) target = $region128
        $region127: #{tpu_custom_call.1} parent=91 // pred_region
          _
        $region128: #{tpu_custom_call.1} parent=91 // pred_fallthru
          _
      $region92: #{tpu_custom_call.1} parent=5 // pred_fallthru
        _
      %p2374 = scmp.le.s32.totalorder 2, %s33
      // Predicated region
      $region129: #{tpu_custom_call.1} parent=5 // pred_check
        %p2375 = pneg %p2374
      $region130: #{tpu_custom_call.1} parent=5 // pred_check_branch
        %2377 = sbr.rel (%p2375) target = $region132
      $region131: #{tpu_custom_call.1} parent=5 // pred_region
        %s2378 = ssub.s32 %s33, 2
        // Predicated region
        $region133: #{tpu_custom_call.1} parent=131 // pred_check
          %p2379 = pneg %p477
        $region134: #{tpu_custom_call.1} parent=131 // pred_check_branch
          %2381 = sbr.rel (%p2379) target = $region136
        $region135: #{tpu_custom_call.1} parent=131 // pred_region
          %p2382 = scmp.lt.s32.totalorder %s44, 1
          %s2383 = scalar_select %p2382, %s44, 1
          %s2384 = smul.addr %s2383, 2
          %s2385 = smul.addr %s2384, 8
          %s2386 = scalar_lea.vmem %s18, %s2385
        $region136: #{tpu_custom_call.1} parent=131 // pred_fallthru
          _
        // Predicated region
        $region137: #{tpu_custom_call.1} parent=131 // pred_check
          %p2387 = pneg %p503
        $region138: #{tpu_custom_call.1} parent=131 // pred_check_branch
          %2389 = sbr.rel (%p2387) target = $region140
        $region139: #{tpu_custom_call.1} parent=131 // pred_region
          %p2390 = scmp.lt.s32.totalorder %s44, 1
          %s2391 = scalar_select %p2390, %s44, 1
          %s2392 = smul.addr %s2391, 2
          %s2393 = smul.addr %s2392, 8
          %s2394 = scalar_lea.vmem %s19, %s2393
        $region140: #{tpu_custom_call.1} parent=131 // pred_fallthru
          _
      $region132: #{tpu_custom_call.1} parent=5 // pred_fallthru
        _
    $region6: #{tpu_custom_call.1} parent=1 // loop_footer
      %s37 = sadd.s32 1, %s33
    $region7: #{tpu_custom_call.1} parent=1 // loop_footer_branch
      %32 = sbr.rel target = $region3
    $region8: #{tpu_custom_call.1} parent=1 // loop_exit
      _
    %2395 = vsyncpa [#allocation11], 1
    %s2396 = scalar_lea.sflag [#allocation11], 1
    %2397 = vsyncpa %s2396, 1
    %2398 = vsyncpa [#allocation13], 1
    %2399 = vsyncpa [#allocation16], 1

</llo_original>
